<compile_context>
chip_gen: v7x
topology: tpu7x:2x2x1
jax: 0.10.0
libtpu: 0.0.40
codegen_flags: <defaults>
</compile_context>

<pallas_src>
import functools
import math

import jax
import jax.numpy as jnp
import numpy as np
from jax.experimental import pallas as pl
from jax.experimental.pallas import tpu as pltpu


# ----------------------------- config ---------------------------------------
EMBED_DIM = 32          # config.embedding_dimension
NUM_HEADS = 4           # config.num_attention_heads
HEAD_DIM = EMBED_DIM // NUM_HEADS
INTERMEDIATE = 64       # config.intermediate_size
LN_EPS = 1e-5

BATCH = 2
SEQ = 8


# ----------------------------- helpers ---------------------------------------
def _layernorm(x, gamma, beta):
    mu = jnp.mean(x, axis=-1, keepdims=True)
    var = jnp.mean((x - mu) ** 2, axis=-1, keepdims=True)
    return (x - mu) * jax.lax.rsqrt(var + LN_EPS) * gamma + beta


def _gelu_exact(x):
    # nn.GELU() default = exact erf formulation
    return 0.5 * x * (1.0 + jax.lax.erf(x * (1.0 / math.sqrt(2.0))))


# ----------------------------- kernel ---------------------------------------
def beit_layer_kernel(
    x_ref,                      # [S, D]   one batch element per grid step
    wqkv_ref,                   # [D, 3D]  (1/sqrt(hd) folded into the Q block)
    bqkv_ref,                   # [1, 3D]
    wo_ref,                     # [D, D]
    w1_ref,                     # [D, I]
    b1_ref,                     # [1, I]
    w2_ref,                     # [I, D]
    pvec_ref,                   # [8, D] rows: bo, b2, g1, be1, g2, be2, 0, 0
    out_ref,                    # [S, D]
    *, num_heads, head_dim,
):
    D = num_heads * head_dim
    x = x_ref[...]                                         # [S, D] f32

    bo = pvec_ref[0:1, :]
    b2 = pvec_ref[1:2, :]
    g1 = pvec_ref[2:3, :]
    be1 = pvec_ref[3:4, :]
    g2 = pvec_ref[4:5, :]
    be2 = pvec_ref[5:6, :]

    # ---- layer_norm_before -------------------------------------------------
    ln1 = _layernorm(x, g1, be1)

    # ---- fused QKV projection (single MXU matmul) ---------------------------
    qkv = (jnp.dot(ln1, wqkv_ref[...], preferred_element_type=jnp.float32)
           + bqkv_ref[...])                                # [S, 3D]

    # ---- per-head attention (scale folded into wq/bq) -----------------------
    # Static unroll over 4 heads; each head's context stays in registers and
    # is concatenated along the lane axis (no VMEM scratch, no masked stores).
    ctx_heads = []
    for h in range(num_heads):
        lo = h * head_dim
        hi = lo + head_dim
        qh = qkv[:, lo:hi]                                  # [S, hd]
        kh = qkv[:, D + lo:D + hi]                          # [S, hd]
        vh = qkv[:, 2 * D + lo:2 * D + hi]                  # [S, hd]

        # q @ k^T without materializing a transpose (contract last dims).
        s = jax.lax.dot_general(qh, kh, (((1,), (1,)), ((), ())),
                                preferred_element_type=jnp.float32)  # [S, S]
        s = s - jnp.max(s, axis=-1, keepdims=True)
        p = jnp.exp(s)
        p = p * pl.reciprocal(jnp.sum(p, axis=-1, keepdims=True), approx=True)
        c = jnp.dot(p, vh, preferred_element_type=jnp.float32)       # [S, hd]
        ctx_heads.append(c)

    ctx = jnp.concatenate(ctx_heads, axis=-1)               # [S, D] in registers

    # ---- attention output projection + residual #1 ---------------------------
    attn_out = jnp.dot(ctx, wo_ref[...],
                       preferred_element_type=jnp.float32) + bo
    hidden = attn_out + x

    # ---- layer_norm_after + feed-forward + residual #2 ------------------------
    ln2 = _layernorm(hidden, g2, be2)
    ff = jnp.dot(ln2, w1_ref[...], preferred_element_type=jnp.float32) + b1_ref[...]
    ff = _gelu_exact(ff)
    out = jnp.dot(ff, w2_ref[...], preferred_element_type=jnp.float32) + b2
    out_ref[...] = (out + hidden).astype(out_ref.dtype)


# ----------------------------- wrapper ---------------------------------------
def beit_layer_forward(x, params):
    B, S, D = x.shape
    I = params["w1"].shape[1]
    H = NUM_HEADS
    hd = D // H
    BS = B * S
    scale = 1.0 / math.sqrt(hd)

    # Fuse QKV weights; fold the attention scale into the Q block.
    wqkv = jnp.concatenate(
        [params["wq"] * scale, params["wk"], params["wv"]], axis=1)   # [D, 3D]
    bqkv = jnp.concatenate(
        [params["bq"] * scale, params["bk"], params["bv"]], axis=1)   # [1, 3D]

    # Pack the small D-wide params into one [8, D] array (rows 6,7 are padding).
    pvec = jnp.concatenate(
        [params["bo"], params["b2"], params["g1"], params["be1"],
         params["g2"], params["be2"], jnp.zeros((2, D), jnp.float32)], axis=0)

    # Row-major flatten: rows [b*S : (b+1)*S] hold batch element b.
    x2d = x.reshape(BS, D)

    kernel = functools.partial(beit_layer_kernel, num_heads=H, head_dim=hd)

    # Grid over the batch dimension: independent ("parallel") -> v7x uses both
    # TensorCores; weight specs return a constant block index so they are
    # fetched once and stay VMEM-resident while activation tiles stream.
    grid_spec = pltpu.PrefetchScalarGridSpec(
        num_scalar_prefetch=0,
        grid=(B,),
        in_specs=[
            pl.BlockSpec((S, D), lambda b: (b, 0)),          # x (one batch per step)
            pl.BlockSpec((D, 3 * D), lambda b: (0, 0)),      # fused qkv weight
            pl.BlockSpec((1, 3 * D), lambda b: (0, 0)),      # fused qkv bias
            pl.BlockSpec((D, D), lambda b: (0, 0)),          # attn output dense
            pl.BlockSpec((D, I), lambda b: (0, 0)),          # ff dense
            pl.BlockSpec((1, I), lambda b: (0, 0)),          # ff bias
            pl.BlockSpec((I, D), lambda b: (0, 0)),          # output dense
            pl.BlockSpec((8, D), lambda b: (0, 0)),          # packed small params
        ],
        out_specs=pl.BlockSpec((S, D), lambda b: (b, 0)),
    )

    out2d = pl.pallas_call(
        kernel,
        out_shape=jax.ShapeDtypeStruct((BS, D), x.dtype),
        grid_spec=grid_spec,
        compiler_params=pltpu.CompilerParams(dimension_semantics=("parallel",)),
    )(x2d, wqkv, bqkv, params["wo"], params["w1"], params["b1"], params["w2"], pvec)

    return out2d.reshape(B, S, D)


# ----------------------------- reference (plain JAX) --------------------------
def beit_layer_reference(x, p):
    def ln(v, g, b):
        mu = jnp.mean(v, axis=-1, keepdims=True)
        var = jnp.mean((v - mu) ** 2, axis=-1, keepdims=True)
        return (v - mu) / jnp.sqrt(var + LN_EPS) * g + b

    B, S, D = x.shape
    ln1 = ln(x, p["g1"], p["be1"])
    q = ln1 @ p["wq"] + p["bq"]
    k = ln1 @ p["wk"] + p["bk"]
    v = ln1 @ p["wv"] + p["bv"]

    def split(t):  # [B,S,D] -> [B,H,S,hd]
        return t.reshape(B, S, NUM_HEADS, HEAD_DIM).transpose(0, 2, 1, 3)

    qh, kh, vh = split(q), split(k), split(v)
    scores = jnp.einsum("bhqd,bhkd->bhqk", qh, kh) / math.sqrt(HEAD_DIM)
    probs = jax.nn.softmax(scores, axis=-1)
    ctx = jnp.einsum("bhqk,bhkd->bhqd", probs, vh)
    ctx = ctx.transpose(0, 2, 1, 3).reshape(B, S, D)

    attn_out = ctx @ p["wo"] + p["bo"]
    hidden = attn_out + x
    ln2 = ln(hidden, p["g2"], p["be2"])
    ff = jax.nn.gelu(ln2 @ p["w1"] + p["b1"], approximate=False)
    return ff @ p["w2"] + p["b2"] + hidden


# ----------------------------- params -----------------------------------------
def make_params(key):
    D, I = EMBED_DIM, INTERMEDIATE
    keys = jax.random.split(key, 8)
    scale = 0.02
    return {
        "wq": jax.random.normal(keys[0], (D, D), jnp.float32) * scale,
        "bq": jnp.zeros((1, D), jnp.float32),
        "wk": jax.random.normal(keys[1], (D, D), jnp.float32) * scale,
        "bk": jnp.zeros((1, D), jnp.float32),
        "wv": jax.random.normal(keys[2], (D, D), jnp.float32) * scale,
        "bv": jnp.zeros((1, D), jnp.float32),
        "wo": jax.random.normal(keys[3], (D, D), jnp.float32) * scale,
        "bo": jax.random.normal(keys[4], (1, D), jnp.float32) * scale,
        "w1": jax.random.normal(keys[5], (D, I), jnp.float32) * scale,
        "b1": jax.random.normal(keys[6], (1, I), jnp.float32) * scale,
        "w2": jax.random.normal(keys[7], (I, D), jnp.float32) * scale,
        "b2": jnp.zeros((1, D), jnp.float32),
        "g1": jnp.ones((1, D), jnp.float32),
        "be1": jnp.zeros((1, D), jnp.float32),
        "g2": jnp.ones((1, D), jnp.float32),
        "be2": jnp.zeros((1, D), jnp.float32),
    }


# ----------------------------- main -------------------------------------------
if __name__ == "__main__":
    key = jax.random.PRNGKey(0)
    kx, kp = jax.random.split(key)
    x = jax.random.normal(kx, (BATCH, SEQ, EMBED_DIM), jnp.float32)
    params = make_params(kp)

    out = jax.block_until_ready(beit_layer_forward(x, params))
    ref = jax.block_until_ready(beit_layer_reference(x, params))
    # tolerance slightly loosened for pl.reciprocal(approx=True) in the softmax denom
    np.testing.assert_allclose(np.asarray(out), np.asarray(ref), rtol=2e-4, atol=2e-4)

    print("KERNEL_OK")
</pallas_src>

<mosaic_0001>
module attributes {stable_mosaic.version = 11 : i64} {
  func.func @beit_layer_kernel(%arg0: i32, %arg1: memref<8x32xf32, #tpu.memory_space<vmem>>, %arg2: memref<32x96xf32, #tpu.memory_space<vmem>>, %arg3: memref<1x96xf32, #tpu.memory_space<vmem>>, %arg4: memref<32x32xf32, #tpu.memory_space<vmem>>, %arg5: memref<32x64xf32, #tpu.memory_space<vmem>>, %arg6: memref<1x64xf32, #tpu.memory_space<vmem>>, %arg7: memref<64x32xf32, #tpu.memory_space<vmem>>, %arg8: memref<8x32xf32, #tpu.memory_space<vmem>>, %arg9: memref<8x32xf32, #tpu.memory_space<vmem>>) attributes {dimension_semantics = [#tpu.dimension_semantics<parallel>], iteration_bounds = array<i64: 2>, scalar_prefetch = 0 : i64, scratch_operands = 0 : i64, tpu.core_type = #tpu.core_type<tc>, window_params = [{transform_indices = @transform_0, window_bounds = array<i64: 8, 32>}, {pipeline_mode = #tpu.pipeline_mode<synchronous>, transform_indices = @transform_1, window_bounds = array<i64: 32, 96>}, {pipeline_mode = #tpu.pipeline_mode<synchronous>, transform_indices = @transform_2, window_bounds = array<i64: 1, 96>}, {pipeline_mode = #tpu.pipeline_mode<synchronous>, transform_indices = @transform_3, window_bounds = array<i64: 32, 32>}, {pipeline_mode = #tpu.pipeline_mode<synchronous>, transform_indices = @transform_4, window_bounds = array<i64: 32, 64>}, {pipeline_mode = #tpu.pipeline_mode<synchronous>, transform_indices = @transform_5, window_bounds = array<i64: 1, 64>}, {pipeline_mode = #tpu.pipeline_mode<synchronous>, transform_indices = @transform_6, window_bounds = array<i64: 64, 32>}, {pipeline_mode = #tpu.pipeline_mode<synchronous>, transform_indices = @transform_7, window_bounds = array<i64: 8, 32>}, {transform_indices = @transform_8, window_bounds = array<i64: 8, 32>}]} {
    %c0 = arith.constant 0 : index
    %c0_0 = arith.constant 0 : index
    %0 = vector.load %arg1[%c0, %c0_0] : memref<8x32xf32, #tpu.memory_space<vmem>>, vector<8x32xf32>
    %c0_1 = arith.constant 0 : index
    %c0_2 = arith.constant 0 : index
    %1 = vector.load %arg8[%c0_1, %c0_2] : memref<8x32xf32, #tpu.memory_space<vmem>>, vector<1x32xf32>
    %c1 = arith.constant 1 : index
    %c0_3 = arith.constant 0 : index
    %2 = vector.load %arg8[%c1, %c0_3] : memref<8x32xf32, #tpu.memory_space<vmem>>, vector<1x32xf32>
    %c2 = arith.constant 2 : index
    %c0_4 = arith.constant 0 : index
    %3 = vector.load %arg8[%c2, %c0_4] : memref<8x32xf32, #tpu.memory_space<vmem>>, vector<1x32xf32>
    %c3 = arith.constant 3 : index
    %c0_5 = arith.constant 0 : index
    %4 = vector.load %arg8[%c3, %c0_5] : memref<8x32xf32, #tpu.memory_space<vmem>>, vector<1x32xf32>
    %c4 = arith.constant 4 : index
    %c0_6 = arith.constant 0 : index
    %5 = vector.load %arg8[%c4, %c0_6] : memref<8x32xf32, #tpu.memory_space<vmem>>, vector<1x32xf32>
    %c5 = arith.constant 5 : index
    %c0_7 = arith.constant 0 : index
    %6 = vector.load %arg8[%c5, %c0_7] : memref<8x32xf32, #tpu.memory_space<vmem>>, vector<1x32xf32>
    %cst = arith.constant dense<0.000000e+00> : vector<8xf32>
    %7 = vector.multi_reduction <add>, %0, %cst [1] : vector<8x32xf32> to vector<8xf32>
    %8 = vector.shape_cast %7 : vector<8xf32> to vector<8x1xf32>
    %cst_8 = arith.constant 3.200000e+01 : f32
    %9 = vector.broadcast %cst_8 : f32 to vector<8x1xf32>
    %10 = arith.divf %8, %9 : vector<8x1xf32>
    %11 = vector.broadcast %10 : vector<8x1xf32> to vector<8x32xf32>
    %12 = arith.subf %0, %11 : vector<8x32xf32>
    %13 = arith.mulf %12, %12 : vector<8x32xf32>
    %cst_9 = arith.constant dense<0.000000e+00> : vector<8xf32>
    %14 = vector.multi_reduction <add>, %13, %cst_9 [1] : vector<8x32xf32> to vector<8xf32>
    %15 = vector.shape_cast %14 : vector<8xf32> to vector<8x1xf32>
    %cst_10 = arith.constant 3.200000e+01 : f32
    %16 = vector.broadcast %cst_10 : f32 to vector<8x1xf32>
    %17 = arith.divf %15, %16 : vector<8x1xf32>
    %18 = vector.broadcast %10 : vector<8x1xf32> to vector<8x32xf32>
    %19 = arith.subf %0, %18 : vector<8x32xf32>
    %cst_11 = arith.constant 9.99999974E-6 : f32
    %20 = vector.broadcast %cst_11 : f32 to vector<8x1xf32>
    %21 = arith.addf %17, %20 : vector<8x1xf32>
    %22 = math.rsqrt %21 : vector<8x1xf32>
    %23 = vector.broadcast %22 : vector<8x1xf32> to vector<8x32xf32>
    %24 = arith.mulf %19, %23 : vector<8x32xf32>
    %25 = vector.broadcast %3 : vector<1x32xf32> to vector<8x32xf32>
    %26 = arith.mulf %24, %25 : vector<8x32xf32>
    %27 = vector.broadcast %4 : vector<1x32xf32> to vector<8x32xf32>
    %28 = arith.addf %26, %27 : vector<8x32xf32>
    %c0_12 = arith.constant 0 : index
    %c0_13 = arith.constant 0 : index
    %29 = vector.load %arg2[%c0_12, %c0_13] : memref<32x96xf32, #tpu.memory_space<vmem>>, vector<32x96xf32>
    %cst_14 = arith.constant dense<0.000000e+00> : vector<8x96xf32>
    %30 = tpu.matmul %28, %29, %cst_14 {dimension_numbers = #tpu.dot_dimension_numbers<[1], [0], [0], [1], [0, 0, 1, 1], [], []>} : vector<8x32xf32>, vector<32x96xf32>, vector<8x96xf32> -> vector<8x96xf32>
    %c0_15 = arith.constant 0 : index
    %c0_16 = arith.constant 0 : index
    %31 = vector.load %arg3[%c0_15, %c0_16] : memref<1x96xf32, #tpu.memory_space<vmem>>, vector<1x96xf32>
    %32 = vector.broadcast %31 : vector<1x96xf32> to vector<8x96xf32>
    %33 = arith.addf %30, %32 : vector<8x96xf32>
    %34 = vector.extract_strided_slice %33 {offsets = [0, 0], sizes = [8, 8], strides = [1, 1]} : vector<8x96xf32> to vector<8x8xf32>
    %35 = vector.extract_strided_slice %33 {offsets = [0, 32], sizes = [8, 8], strides = [1, 1]} : vector<8x96xf32> to vector<8x8xf32>
    %36 = vector.extract_strided_slice %33 {offsets = [0, 64], sizes = [8, 8], strides = [1, 1]} : vector<8x96xf32> to vector<8x8xf32>
    %cst_17 = arith.constant dense<0.000000e+00> : vector<8x8xf32>
    %37 = tpu.matmul %34, %35, %cst_17 {dimension_numbers = #tpu.dot_dimension_numbers<[1], [1], [0], [0], [0, 0, 1, 0], [], []>} : vector<8x8xf32>, vector<8x8xf32>, vector<8x8xf32> -> vector<8x8xf32>
    %cst_18 = arith.constant dense<0xFF800000> : vector<8xf32>
    %38 = vector.multi_reduction <maximumf>, %37, %cst_18 [1] : vector<8x8xf32> to vector<8xf32>
    %39 = vector.shape_cast %38 : vector<8xf32> to vector<8x1xf32>
    %40 = vector.broadcast %39 : vector<8x1xf32> to vector<8x8xf32>
    %41 = arith.subf %37, %40 : vector<8x8xf32>
    %42 = math.exp %41 : vector<8x8xf32>
    %cst_19 = arith.constant dense<0.000000e+00> : vector<8xf32>
    %43 = vector.multi_reduction <add>, %42, %cst_19 [1] : vector<8x8xf32> to vector<8xf32>
    %44 = vector.shape_cast %43 : vector<8xf32> to vector<8x1xf32>
    %45 = tpu.reciprocal %44 {approx = true} : vector<8x1xf32> -> vector<8x1xf32>
    %46 = vector.broadcast %45 : vector<8x1xf32> to vector<8x8xf32>
    %47 = arith.mulf %42, %46 : vector<8x8xf32>
    %cst_20 = arith.constant dense<0.000000e+00> : vector<8x8xf32>
    %48 = tpu.matmul %47, %36, %cst_20 {dimension_numbers = #tpu.dot_dimension_numbers<[1], [0], [0], [1], [0, 0, 1, 1], [], []>} : vector<8x8xf32>, vector<8x8xf32>, vector<8x8xf32> -> vector<8x8xf32>
    %49 = vector.extract_strided_slice %33 {offsets = [0, 8], sizes = [8, 8], strides = [1, 1]} : vector<8x96xf32> to vector<8x8xf32>
    %50 = vector.extract_strided_slice %33 {offsets = [0, 40], sizes = [8, 8], strides = [1, 1]} : vector<8x96xf32> to vector<8x8xf32>
    %51 = vector.extract_strided_slice %33 {offsets = [0, 72], sizes = [8, 8], strides = [1, 1]} : vector<8x96xf32> to vector<8x8xf32>
    %cst_21 = arith.constant dense<0.000000e+00> : vector<8x8xf32>
    %52 = tpu.matmul %49, %50, %cst_21 {dimension_numbers = #tpu.dot_dimension_numbers<[1], [1], [0], [0], [0, 0, 1, 0], [], []>} : vector<8x8xf32>, vector<8x8xf32>, vector<8x8xf32> -> vector<8x8xf32>
    %cst_22 = arith.constant dense<0xFF800000> : vector<8xf32>
    %53 = vector.multi_reduction <maximumf>, %52, %cst_22 [1] : vector<8x8xf32> to vector<8xf32>
    %54 = vector.shape_cast %53 : vector<8xf32> to vector<8x1xf32>
    %55 = vector.broadcast %54 : vector<8x1xf32> to vector<8x8xf32>
    %56 = arith.subf %52, %55 : vector<8x8xf32>
    %57 = math.exp %56 : vector<8x8xf32>
    %cst_23 = arith.constant dense<0.000000e+00> : vector<8xf32>
    %58 = vector.multi_reduction <add>, %57, %cst_23 [1] : vector<8x8xf32> to vector<8xf32>
    %59 = vector.shape_cast %58 : vector<8xf32> to vector<8x1xf32>
    %60 = tpu.reciprocal %59 {approx = true} : vector<8x1xf32> -> vector<8x1xf32>
    %61 = vector.broadcast %60 : vector<8x1xf32> to vector<8x8xf32>
    %62 = arith.mulf %57, %61 : vector<8x8xf32>
    %cst_24 = arith.constant dense<0.000000e+00> : vector<8x8xf32>
    %63 = tpu.matmul %62, %51, %cst_24 {dimension_numbers = #tpu.dot_dimension_numbers<[1], [0], [0], [1], [0, 0, 1, 1], [], []>} : vector<8x8xf32>, vector<8x8xf32>, vector<8x8xf32> -> vector<8x8xf32>
    %64 = vector.extract_strided_slice %33 {offsets = [0, 16], sizes = [8, 8], strides = [1, 1]} : vector<8x96xf32> to vector<8x8xf32>
    %65 = vector.extract_strided_slice %33 {offsets = [0, 48], sizes = [8, 8], strides = [1, 1]} : vector<8x96xf32> to vector<8x8xf32>
    %66 = vector.extract_strided_slice %33 {offsets = [0, 80], sizes = [8, 8], strides = [1, 1]} : vector<8x96xf32> to vector<8x8xf32>
    %cst_25 = arith.constant dense<0.000000e+00> : vector<8x8xf32>
    %67 = tpu.matmul %64, %65, %cst_25 {dimension_numbers = #tpu.dot_dimension_numbers<[1], [1], [0], [0], [0, 0, 1, 0], [], []>} : vector<8x8xf32>, vector<8x8xf32>, vector<8x8xf32> -> vector<8x8xf32>
    %cst_26 = arith.constant dense<0xFF800000> : vector<8xf32>
    %68 = vector.multi_reduction <maximumf>, %67, %cst_26 [1] : vector<8x8xf32> to vector<8xf32>
    %69 = vector.shape_cast %68 : vector<8xf32> to vector<8x1xf32>
    %70 = vector.broadcast %69 : vector<8x1xf32> to vector<8x8xf32>
    %71 = arith.subf %67, %70 : vector<8x8xf32>
    %72 = math.exp %71 : vector<8x8xf32>
    %cst_27 = arith.constant dense<0.000000e+00> : vector<8xf32>
    %73 = vector.multi_reduction <add>, %72, %cst_27 [1] : vector<8x8xf32> to vector<8xf32>
    %74 = vector.shape_cast %73 : vector<8xf32> to vector<8x1xf32>
    %75 = tpu.reciprocal %74 {approx = true} : vector<8x1xf32> -> vector<8x1xf32>
    %76 = vector.broadcast %75 : vector<8x1xf32> to vector<8x8xf32>
    %77 = arith.mulf %72, %76 : vector<8x8xf32>
    %cst_28 = arith.constant dense<0.000000e+00> : vector<8x8xf32>
    %78 = tpu.matmul %77, %66, %cst_28 {dimension_numbers = #tpu.dot_dimension_numbers<[1], [0], [0], [1], [0, 0, 1, 1], [], []>} : vector<8x8xf32>, vector<8x8xf32>, vector<8x8xf32> -> vector<8x8xf32>
    %79 = vector.extract_strided_slice %33 {offsets = [0, 24], sizes = [8, 8], strides = [1, 1]} : vector<8x96xf32> to vector<8x8xf32>
    %80 = vector.extract_strided_slice %33 {offsets = [0, 56], sizes = [8, 8], strides = [1, 1]} : vector<8x96xf32> to vector<8x8xf32>
    %81 = vector.extract_strided_slice %33 {offsets = [0, 88], sizes = [8, 8], strides = [1, 1]} : vector<8x96xf32> to vector<8x8xf32>
    %cst_29 = arith.constant dense<0.000000e+00> : vector<8x8xf32>
    %82 = tpu.matmul %79, %80, %cst_29 {dimension_numbers = #tpu.dot_dimension_numbers<[1], [1], [0], [0], [0, 0, 1, 0], [], []>} : vector<8x8xf32>, vector<8x8xf32>, vector<8x8xf32> -> vector<8x8xf32>
    %cst_30 = arith.constant dense<0xFF800000> : vector<8xf32>
    %83 = vector.multi_reduction <maximumf>, %82, %cst_30 [1] : vector<8x8xf32> to vector<8xf32>
    %84 = vector.shape_cast %83 : vector<8xf32> to vector<8x1xf32>
    %85 = vector.broadcast %84 : vector<8x1xf32> to vector<8x8xf32>
    %86 = arith.subf %82, %85 : vector<8x8xf32>
    %87 = math.exp %86 : vector<8x8xf32>
    %cst_31 = arith.constant dense<0.000000e+00> : vector<8xf32>
    %88 = vector.multi_reduction <add>, %87, %cst_31 [1] : vector<8x8xf32> to vector<8xf32>
    %89 = vector.shape_cast %88 : vector<8xf32> to vector<8x1xf32>
    %90 = tpu.reciprocal %89 {approx = true} : vector<8x1xf32> -> vector<8x1xf32>
    %91 = vector.broadcast %90 : vector<8x1xf32> to vector<8x8xf32>
    %92 = arith.mulf %87, %91 : vector<8x8xf32>
    %cst_32 = arith.constant dense<0.000000e+00> : vector<8x8xf32>
    %93 = tpu.matmul %92, %81, %cst_32 {dimension_numbers = #tpu.dot_dimension_numbers<[1], [0], [0], [1], [0, 0, 1, 1], [], []>} : vector<8x8xf32>, vector<8x8xf32>, vector<8x8xf32> -> vector<8x8xf32>
    %94 = tpu.concatenate %48, %63, %78, %93 in 1 : vector<8x8xf32>, vector<8x8xf32>, vector<8x8xf32>, vector<8x8xf32> -> vector<8x32xf32>
    %c0_33 = arith.constant 0 : index
    %c0_34 = arith.constant 0 : index
    %95 = vector.load %arg4[%c0_33, %c0_34] : memref<32x32xf32, #tpu.memory_space<vmem>>, vector<32x32xf32>
    %cst_35 = arith.constant dense<0.000000e+00> : vector<8x32xf32>
    %96 = tpu.matmul %94, %95, %cst_35 {dimension_numbers = #tpu.dot_dimension_numbers<[1], [0], [0], [1], [0, 0, 1, 1], [], []>} : vector<8x32xf32>, vector<32x32xf32>, vector<8x32xf32> -> vector<8x32xf32>
    %97 = vector.broadcast %1 : vector<1x32xf32> to vector<8x32xf32>
    %98 = arith.addf %96, %97 : vector<8x32xf32>
    %99 = arith.addf %98, %0 : vector<8x32xf32>
    %cst_36 = arith.constant dense<0.000000e+00> : vector<8xf32>
    %100 = vector.multi_reduction <add>, %99, %cst_36 [1] : vector<8x32xf32> to vector<8xf32>
    %101 = vector.shape_cast %100 : vector<8xf32> to vector<8x1xf32>
    %cst_37 = arith.constant 3.200000e+01 : f32
    %102 = vector.broadcast %cst_37 : f32 to vector<8x1xf32>
    %103 = arith.divf %101, %102 : vector<8x1xf32>
    %104 = vector.broadcast %103 : vector<8x1xf32> to vector<8x32xf32>
    %105 = arith.subf %99, %104 : vector<8x32xf32>
    %106 = arith.mulf %105, %105 : vector<8x32xf32>
    %cst_38 = arith.constant dense<0.000000e+00> : vector<8xf32>
    %107 = vector.multi_reduction <add>, %106, %cst_38 [1] : vector<8x32xf32> to vector<8xf32>
    %108 = vector.shape_cast %107 : vector<8xf32> to vector<8x1xf32>
    %cst_39 = arith.constant 3.200000e+01 : f32
    %109 = vector.broadcast %cst_39 : f32 to vector<8x1xf32>
    %110 = arith.divf %108, %109 : vector<8x1xf32>
    %111 = vector.broadcast %103 : vector<8x1xf32> to vector<8x32xf32>
    %112 = arith.subf %99, %111 : vector<8x32xf32>
    %cst_40 = arith.constant 9.99999974E-6 : f32
    %113 = vector.broadcast %cst_40 : f32 to vector<8x1xf32>
    %114 = arith.addf %110, %113 : vector<8x1xf32>
    %115 = math.rsqrt %114 : vector<8x1xf32>
    %116 = vector.broadcast %115 : vector<8x1xf32> to vector<8x32xf32>
    %117 = arith.mulf %112, %116 : vector<8x32xf32>
    %118 = vector.broadcast %5 : vector<1x32xf32> to vector<8x32xf32>
    %119 = arith.mulf %117, %118 : vector<8x32xf32>
    %120 = vector.broadcast %6 : vector<1x32xf32> to vector<8x32xf32>
    %121 = arith.addf %119, %120 : vector<8x32xf32>
    %c0_41 = arith.constant 0 : index
    %c0_42 = arith.constant 0 : index
    %122 = vector.load %arg5[%c0_41, %c0_42] : memref<32x64xf32, #tpu.memory_space<vmem>>, vector<32x64xf32>
    %cst_43 = arith.constant dense<0.000000e+00> : vector<8x64xf32>
    %123 = tpu.matmul %121, %122, %cst_43 {dimension_numbers = #tpu.dot_dimension_numbers<[1], [0], [0], [1], [0, 0, 1, 1], [], []>} : vector<8x32xf32>, vector<32x64xf32>, vector<8x64xf32> -> vector<8x64xf32>
    %c0_44 = arith.constant 0 : index
    %c0_45 = arith.constant 0 : index
    %124 = vector.load %arg6[%c0_44, %c0_45] : memref<1x64xf32, #tpu.memory_space<vmem>>, vector<1x64xf32>
    %125 = vector.broadcast %124 : vector<1x64xf32> to vector<8x64xf32>
    %126 = arith.addf %123, %125 : vector<8x64xf32>
    %cst_46 = arith.constant 5.000000e-01 : f32
    %127 = vector.broadcast %cst_46 : f32 to vector<8x64xf32>
    %128 = arith.mulf %127, %126 : vector<8x64xf32>
    %cst_47 = arith.constant 0.707106769 : f32
    %129 = vector.broadcast %cst_47 : f32 to vector<8x64xf32>
    %130 = arith.mulf %126, %129 : vector<8x64xf32>
    %131 = math.erf %130 : vector<8x64xf32>
    %cst_48 = arith.constant 1.000000e+00 : f32
    %132 = vector.broadcast %cst_48 : f32 to vector<8x64xf32>
    %133 = arith.addf %132, %131 : vector<8x64xf32>
    %134 = arith.mulf %128, %133 : vector<8x64xf32>
    %c0_49 = arith.constant 0 : index
    %c0_50 = arith.constant 0 : index
    %135 = vector.load %arg7[%c0_49, %c0_50] : memref<64x32xf32, #tpu.memory_space<vmem>>, vector<64x32xf32>
    %cst_51 = arith.constant dense<0.000000e+00> : vector<8x32xf32>
    %136 = tpu.matmul %134, %135, %cst_51 {dimension_numbers = #tpu.dot_dimension_numbers<[1], [0], [0], [1], [0, 0, 1, 1], [], []>} : vector<8x64xf32>, vector<64x32xf32>, vector<8x32xf32> -> vector<8x32xf32>
    %137 = vector.broadcast %2 : vector<1x32xf32> to vector<8x32xf32>
    %138 = arith.addf %136, %137 : vector<8x32xf32>
    %139 = arith.addf %138, %99 : vector<8x32xf32>
    %c0_52 = arith.constant 0 : index
    %c0_53 = arith.constant 0 : index
    %140 = vector.load %arg9[%c0_52, %c0_53] : memref<8x32xf32, #tpu.memory_space<vmem>>, vector<8x32xf32>
    tpu.vector_store %arg9[%c0_52, %c0_53], %139 {strides = array<i32>} : memref<8x32xf32, #tpu.memory_space<vmem>>, vector<8x32xf32>,
    return
  }
  func.func @transform_0(%arg0: i32) -> (i32, i32) {
    %c0_i32 = arith.constant 0 : i32
    %c0_i32_0 = arith.constant 0 : i32
    return %arg0, %c0_i32 : i32, i32
  }
  func.func @transform_1(%arg0: i32) -> (i32, i32) {
    %c0_i32 = arith.constant 0 : i32
    %c0_i32_0 = arith.constant 0 : i32
    %c0_i32_1 = arith.constant 0 : i32
    return %c0_i32, %c0_i32_0 : i32, i32
  }
  func.func @transform_2(%arg0: i32) -> (i32, i32) {
    %c0_i32 = arith.constant 0 : i32
    %c0_i32_0 = arith.constant 0 : i32
    %c0_i32_1 = arith.constant 0 : i32
    return %c0_i32, %c0_i32_0 : i32, i32
  }
  func.func @transform_3(%arg0: i32) -> (i32, i32) {
    %c0_i32 = arith.constant 0 : i32
    %c0_i32_0 = arith.constant 0 : i32
    %c0_i32_1 = arith.constant 0 : i32
    return %c0_i32, %c0_i32_0 : i32, i32
  }
  func.func @transform_4(%arg0: i32) -> (i32, i32) {
    %c0_i32 = arith.constant 0 : i32
    %c0_i32_0 = arith.constant 0 : i32
    %c0_i32_1 = arith.constant 0 : i32
    return %c0_i32, %c0_i32_0 : i32, i32
  }
  func.func @transform_5(%arg0: i32) -> (i32, i32) {
    %c0_i32 = arith.constant 0 : i32
    %c0_i32_0 = arith.constant 0 : i32
    %c0_i32_1 = arith.constant 0 : i32
    return %c0_i32, %c0_i32_0 : i32, i32
  }
  func.func @transform_6(%arg0: i32) -> (i32, i32) {
    %c0_i32 = arith.constant 0 : i32
    %c0_i32_0 = arith.constant 0 : i32
    %c0_i32_1 = arith.constant 0 : i32
    return %c0_i32, %c0_i32_0 : i32, i32
  }
  func.func @transform_7(%arg0: i32) -> (i32, i32) {
    %c0_i32 = arith.constant 0 : i32
    %c0_i32_0 = arith.constant 0 : i32
    %c0_i32_1 = arith.constant 0 : i32
    return %c0_i32, %c0_i32_0 : i32, i32
  }
  func.func @transform_8(%arg0: i32) -> (i32, i32) {
    %c0_i32 = arith.constant 0 : i32
    %c0_i32_0 = arith.constant 0 : i32
    return %arg0, %c0_i32 : i32, i32
  }
}

</mosaic_0001>

<llo_original>
// kernel: tpu_custom_call.1
$region0: #{tpu_custom_call.1}
  #allocation0 [shape = 'u32[]', space=smem, size = 0x4, offset = 0x4, fixed_abs, tag = 'smem constant byte address 0x4 - core index']
  #allocation1 [shape = 'u32[144,128]{1,0:T(1,128)}', space=vmem, size = 0x12000, scoped, tag = 'internal scratch']
  %s0 = inlined_call_operand.hbm [shape: f32[16,32], index: 0, kind: input, shape index: {}]
  %s1 = inlined_call_operand.vmem [shape: f32[32,96], index: 1, kind: input, shape index: {}]
  %s2 = inlined_call_operand.vmem [shape: f32[1,96], index: 2, kind: input, shape index: {}]
  %s3 = inlined_call_operand.vmem [shape: f32[32,32], index: 3, kind: input, shape index: {}]
  %s4 = inlined_call_operand.vmem [shape: f32[32,64], index: 4, kind: input, shape index: {}]
  %s5 = inlined_call_operand.vmem [shape: f32[1,64], index: 5, kind: input, shape index: {}]
  %s6 = inlined_call_operand.vmem [shape: f32[64,32], index: 6, kind: input, shape index: {}]
  %s7 = inlined_call_operand.vmem [shape: f32[8,32], index: 7, kind: input, shape index: {}]
  %s8 = inlined_call_operand.hbm [shape: f32[16,32], index: 8, kind: output, shape index: {}]
  %s9 = sld [smem:[#allocation0]]
  $region69: #{tpu_custom_call.1} parent=0
    _
  %s11 = ssub.s32 1, %s9
  %s12 = scalar_select 0, %s11, %s9
  $region1: #{tpu_custom_call.1} parent=0
    #allocation2 [shape = 'u8[8192]{0}', space=vmem, size = 0x2000, scoped, tag = 'input window, operand 0']
    #allocation3 [shape = 's32[2]{0}', space=sflag, size = 0x8, scoped, tag = 'scoped memory for tpu_custom_call.1']
    #allocation4 [shape = 's32[2]{0}', space=sflag, size = 0x8, scoped, tag = 'scoped memory for tpu_custom_call.1']
    #allocation5 [shape = 'u8[8192]{0}', space=vmem, size = 0x2000, scoped, tag = 'output window, operand 0']
    %13 = vsyncpa [#allocation3], 0
    %s14 = scalar_lea.sflag [#allocation3], 1
    %15 = vsyncpa %s14, 0
    %16 = vsyncpa [#allocation4], 0
    %s17 = scalar_lea.sflag [#allocation4], 1
    %18 = vsyncpa %s17, 0
    loop: start=0, step=1, limit=4
    $region2: #{tpu_custom_call.1} parent=1 // loop_pre_header
      _
    $region3: #{tpu_custom_call.1} parent=1 // loop_header
      %s20 = sphi 0, %s24
      %p21 = scmp.ge.s32.totalorder %s20, 4
      %s30 = sphi 0, %s32
      %s33 = sphi 0, %s30
      %s34 = sphi 0, %s33
      %s50 = sphi 0, %s34
      %s54 = sphi 0, %s54
      %s56 = sphi 0, %s54
      %s57 = sphi 0, %s56
      %s71 = sphi 0, %s57
      %s75 = sphi 0, %s75
      %s77 = sphi 0, %s75
      %s78 = sphi 0, %s77
      %s92 = sphi 0, %s78
      %s96 = sphi 0, %s96
      %s98 = sphi 0, %s96
      %s99 = sphi 0, %s98
      %s113 = sphi 0, %s99
      %s117 = sphi 0, %s117
      %s119 = sphi 0, %s117
      %s120 = sphi 0, %s119
      %s134 = sphi 0, %s120
      %s138 = sphi 0, %s138
      %s140 = sphi 0, %s138
      %s141 = sphi 0, %s140
      %s155 = sphi 0, %s141
      %s159 = sphi 0, %s159
      %s161 = sphi 0, %s159
      %s162 = sphi 0, %s161
      %s176 = sphi 0, %s162
      %s180 = sphi 0, %s180
      %s182 = sphi 0, %s180
      %s183 = sphi 0, %s182
      %s197 = sphi 0, %s183
      %s203 = sphi 0, %s205
      %s206 = sphi 0, %s203
      %s207 = sphi 0, %s206
      %s223 = sphi 0, %s207
    $region4: #{tpu_custom_call.1} parent=1 // loop_header_branch
      %23 = sbr.rel (%p21) target = $region8
    $region5: #{tpu_custom_call.1} parent=1 // loop_body
      %s25 = ssub.s32 %s20, 1
      %s26 = ssub.s32 %s20, 2
      %s27 = sadd.s32 %s20, 1
      %s28 = ssub.s32 %s20, %s27
      %p29 = scmp.eq.s32.totalorder %s28, 0
      %s31 = sadd.s32 %s30, 1
      %s32 = scalar_select %p29, %s30, %s31
      %p35 = pneg %p29
      %p36 = scmp.eq.s32.totalorder %s20, 1
      %p37 = por %p35, %p36
      %p38 = scmp.ne.s32.totalorder %s30, %s33
      %p39 = scmp.eq.s32.totalorder %s20, 0
      %p40 = por %p38, %p39
      %p41 = scmp.ne.s32.totalorder %s30, %s33
      %p42 = scmp.eq.s32.totalorder %s25, 1
      %p43 = por %p41, %p42
      %p44 = scmp.ne.s32.totalorder %s33, %s34
      %p45 = scmp.eq.s32.totalorder %s25, 0
      %p46 = por %p44, %p45
      %p47 = scmp.ne.s32.totalorder %s33, %s34
      %p48 = scmp.eq.s32.totalorder %s26, 1
      %p49 = por %p47, %p48
      %p51 = scmp.ne.s32.totalorder %s34, %s50
      %p52 = scmp.eq.s32.totalorder %s26, 0
      %p53 = por %p51, %p52
      %s55 = sadd.s32 %s54, 1
      %p58 = scmp.eq.s32.totalorder %s20, 1
      %p59 = scmp.ne.s32.totalorder %s54, %s56
      %p60 = scmp.eq.s32.totalorder %s20, 0
      %p61 = por %p59, %p60
      %p62 = scmp.ne.s32.totalorder %s54, %s56
      %p63 = scmp.eq.s32.totalorder %s25, 1
      %p64 = por %p62, %p63
      %p65 = scmp.ne.s32.totalorder %s56, %s57
      %p66 = scmp.eq.s32.totalorder %s25, 0
      %p67 = por %p65, %p66
      %p68 = scmp.ne.s32.totalorder %s56, %s57
      %p69 = scmp.eq.s32.totalorder %s26, 1
      %p70 = por %p68, %p69
      %p72 = scmp.ne.s32.totalorder %s57, %s71
      %p73 = scmp.eq.s32.totalorder %s26, 0
      %p74 = por %p72, %p73
      %s76 = sadd.s32 %s75, 1
      %p79 = scmp.eq.s32.totalorder %s20, 1
      %p80 = scmp.ne.s32.totalorder %s75, %s77
      %p81 = scmp.eq.s32.totalorder %s20, 0
      %p82 = por %p80, %p81
      %p83 = scmp.ne.s32.totalorder %s75, %s77
      %p84 = scmp.eq.s32.totalorder %s25, 1
      %p85 = por %p83, %p84
      %p86 = scmp.ne.s32.totalorder %s77, %s78
      %p87 = scmp.eq.s32.totalorder %s25, 0
      %p88 = por %p86, %p87
      %p89 = scmp.ne.s32.totalorder %s77, %s78
      %p90 = scmp.eq.s32.totalorder %s26, 1
      %p91 = por %p89, %p90
      %p93 = scmp.ne.s32.totalorder %s78, %s92
      %p94 = scmp.eq.s32.totalorder %s26, 0
      %p95 = por %p93, %p94
      %s97 = sadd.s32 %s96, 1
      %p100 = scmp.eq.s32.totalorder %s20, 1
      %p101 = scmp.ne.s32.totalorder %s96, %s98
      %p102 = scmp.eq.s32.totalorder %s20, 0
      %p103 = por %p101, %p102
      %p104 = scmp.ne.s32.totalorder %s96, %s98
      %p105 = scmp.eq.s32.totalorder %s25, 1
      %p106 = por %p104, %p105
      %p107 = scmp.ne.s32.totalorder %s98, %s99
      %p108 = scmp.eq.s32.totalorder %s25, 0
      %p109 = por %p107, %p108
      %p110 = scmp.ne.s32.totalorder %s98, %s99
      %p111 = scmp.eq.s32.totalorder %s26, 1
      %p112 = por %p110, %p111
      %p114 = scmp.ne.s32.totalorder %s99, %s113
      %p115 = scmp.eq.s32.totalorder %s26, 0
      %p116 = por %p114, %p115
      %s118 = sadd.s32 %s117, 1
      %p121 = scmp.eq.s32.totalorder %s20, 1
      %p122 = scmp.ne.s32.totalorder %s117, %s119
      %p123 = scmp.eq.s32.totalorder %s20, 0
      %p124 = por %p122, %p123
      %p125 = scmp.ne.s32.totalorder %s117, %s119
      %p126 = scmp.eq.s32.totalorder %s25, 1
      %p127 = por %p125, %p126
      %p128 = scmp.ne.s32.totalorder %s119, %s120
      %p129 = scmp.eq.s32.totalorder %s25, 0
      %p130 = por %p128, %p129
      %p131 = scmp.ne.s32.totalorder %s119, %s120
      %p132 = scmp.eq.s32.totalorder %s26, 1
      %p133 = por %p131, %p132
      %p135 = scmp.ne.s32.totalorder %s120, %s134
      %p136 = scmp.eq.s32.totalorder %s26, 0
      %p137 = por %p135, %p136
      %s139 = sadd.s32 %s138, 1
      %p142 = scmp.eq.s32.totalorder %s20, 1
      %p143 = scmp.ne.s32.totalorder %s138, %s140
      %p144 = scmp.eq.s32.totalorder %s20, 0
      %p145 = por %p143, %p144
      %p146 = scmp.ne.s32.totalorder %s138, %s140
      %p147 = scmp.eq.s32.totalorder %s25, 1
      %p148 = por %p146, %p147
      %p149 = scmp.ne.s32.totalorder %s140, %s141
      %p150 = scmp.eq.s32.totalorder %s25, 0
      %p151 = por %p149, %p150
      %p152 = scmp.ne.s32.totalorder %s140, %s141
      %p153 = scmp.eq.s32.totalorder %s26, 1
      %p154 = por %p152, %p153
      %p156 = scmp.ne.s32.totalorder %s141, %s155
      %p157 = scmp.eq.s32.totalorder %s26, 0
      %p158 = por %p156, %p157
      %s160 = sadd.s32 %s159, 1
      %p163 = scmp.eq.s32.totalorder %s20, 1
      %p164 = scmp.ne.s32.totalorder %s159, %s161
      %p165 = scmp.eq.s32.totalorder %s20, 0
      %p166 = por %p164, %p165
      %p167 = scmp.ne.s32.totalorder %s159, %s161
      %p168 = scmp.eq.s32.totalorder %s25, 1
      %p169 = por %p167, %p168
      %p170 = scmp.ne.s32.totalorder %s161, %s162
      %p171 = scmp.eq.s32.totalorder %s25, 0
      %p172 = por %p170, %p171
      %p173 = scmp.ne.s32.totalorder %s161, %s162
      %p174 = scmp.eq.s32.totalorder %s26, 1
      %p175 = por %p173, %p174
      %p177 = scmp.ne.s32.totalorder %s162, %s176
      %p178 = scmp.eq.s32.totalorder %s26, 0
      %p179 = por %p177, %p178
      %s181 = sadd.s32 %s180, 1
      %p184 = scmp.eq.s32.totalorder %s20, 1
      %p185 = scmp.ne.s32.totalorder %s180, %s182
      %p186 = scmp.eq.s32.totalorder %s20, 0
      %p187 = por %p185, %p186
      %p188 = scmp.ne.s32.totalorder %s180, %s182
      %p189 = scmp.eq.s32.totalorder %s25, 1
      %p190 = por %p188, %p189
      %p191 = scmp.ne.s32.totalorder %s182, %s183
      %p192 = scmp.eq.s32.totalorder %s25, 0
      %p193 = por %p191, %p192
      %p194 = scmp.ne.s32.totalorder %s182, %s183
      %p195 = scmp.eq.s32.totalorder %s26, 1
      %p196 = por %p194, %p195
      %p198 = scmp.ne.s32.totalorder %s183, %s197
      %p199 = scmp.eq.s32.totalorder %s26, 0
      %p200 = por %p198, %p199
      %s201 = ssub.s32 %s20, %s27
      %p202 = scmp.eq.s32.totalorder %s201, 0
      %s204 = sadd.s32 %s203, 1
      %s205 = scalar_select %p202, %s203, %s204
      %p208 = pneg %p202
      %p209 = scmp.eq.s32.totalorder %s20, 1
      %p210 = por %p208, %p209
      %p211 = scmp.ne.s32.totalorder %s203, %s206
      %p212 = scmp.eq.s32.totalorder %s20, 0
      %p213 = por %p211, %p212
      %p214 = scmp.ne.s32.totalorder %s203, %s206
      %p215 = scmp.eq.s32.totalorder %s25, 1
      %p216 = por %p214, %p215
      %p217 = scmp.ne.s32.totalorder %s206, %s207
      %p218 = scmp.eq.s32.totalorder %s25, 0
      %p219 = por %p217, %p218
      %p220 = scmp.ne.s32.totalorder %s206, %s207
      %p221 = scmp.eq.s32.totalorder %s26, 1
      %p222 = por %p220, %p221
      %p224 = scmp.ne.s32.totalorder %s207, %s223
      %p225 = scmp.eq.s32.totalorder %s26, 0
      %p226 = por %p224, %p225
      %p227 = scmp.le.s32.totalorder 1, %s20
      %p228 = scmp.lt.s32.totalorder %s20, 3
      %p229 = pnand %p227, %p228
      %p230 = pneg %p229
      // Predicated region
      $region9: #{tpu_custom_call.1} parent=5 // pred_check
        _
      $region10: #{tpu_custom_call.1} parent=5 // pred_check_branch
        %232 = sbr.rel (%p229) target = $region12
      $region11: #{tpu_custom_call.1} parent=5 // pred_region
        %s233 = ssub.s32 %s20, 1
        // Predicated region
        $region13: #{tpu_custom_call.1} parent=11 // pred_check
          %p234 = pneg %p67
        $region14: #{tpu_custom_call.1} parent=11 // pred_check_branch
          %236 = sbr.rel (%p234) target = $region16
        $region15: #{tpu_custom_call.1} parent=11 // pred_region
          _
        $region16: #{tpu_custom_call.1} parent=11 // pred_fallthru
          _
        // Predicated region
        $region17: #{tpu_custom_call.1} parent=11 // pred_check
          %p237 = pneg %p88
        $region18: #{tpu_custom_call.1} parent=11 // pred_check_branch
          %239 = sbr.rel (%p237) target = $region20
        $region19: #{tpu_custom_call.1} parent=11 // pred_region
          _
        $region20: #{tpu_custom_call.1} parent=11 // pred_fallthru
          _
        // Predicated region
        $region21: #{tpu_custom_call.1} parent=11 // pred_check
          %p240 = pneg %p109
        $region22: #{tpu_custom_call.1} parent=11 // pred_check_branch
          %242 = sbr.rel (%p240) target = $region24
        $region23: #{tpu_custom_call.1} parent=11 // pred_region
          _
        $region24: #{tpu_custom_call.1} parent=11 // pred_fallthru
          _
        // Predicated region
        $region25: #{tpu_custom_call.1} parent=11 // pred_check
          %p243 = pneg %p130
        $region26: #{tpu_custom_call.1} parent=11 // pred_check_branch
          %245 = sbr.rel (%p243) target = $region28
        $region27: #{tpu_custom_call.1} parent=11 // pred_region
          _
        $region28: #{tpu_custom_call.1} parent=11 // pred_fallthru
          _
        // Predicated region
        $region29: #{tpu_custom_call.1} parent=11 // pred_check
          %p246 = pneg %p151
        $region30: #{tpu_custom_call.1} parent=11 // pred_check_branch
          %248 = sbr.rel (%p246) target = $region32
        $region31: #{tpu_custom_call.1} parent=11 // pred_region
          _
        $region32: #{tpu_custom_call.1} parent=11 // pred_fallthru
          _
        // Predicated region
        $region33: #{tpu_custom_call.1} parent=11 // pred_check
          %p249 = pneg %p172
        $region34: #{tpu_custom_call.1} parent=11 // pred_check_branch
          %251 = sbr.rel (%p249) target = $region36
        $region35: #{tpu_custom_call.1} parent=11 // pred_region
          _
        $region36: #{tpu_custom_call.1} parent=11 // pred_fallthru
          _
        // Predicated region
        $region37: #{tpu_custom_call.1} parent=11 // pred_check
          %p252 = pneg %p193
        $region38: #{tpu_custom_call.1} parent=11 // pred_check_branch
          %254 = sbr.rel (%p252) target = $region40
        $region39: #{tpu_custom_call.1} parent=11 // pred_region
          _
        $region40: #{tpu_custom_call.1} parent=11 // pred_fallthru
          _
      $region12: #{tpu_custom_call.1} parent=5 // pred_fallthru
        _
      %p255 = scmp.lt.s32.totalorder %s20, 2
      // Predicated region
      $region41: #{tpu_custom_call.1} parent=5 // pred_check
        %p256 = pneg %p255
      $region42: #{tpu_custom_call.1} parent=5 // pred_check_branch
        %258 = sbr.rel (%p256) target = $region44
      $region43: #{tpu_custom_call.1} parent=5 // pred_region
        // Predicated region
        $region45: #{tpu_custom_call.1} parent=43 // pred_check
          %p259 = pneg %p40
        $region46: #{tpu_custom_call.1} parent=43 // pred_check_branch
          %261 = sbr.rel (%p259) target = $region48
        $region47: #{tpu_custom_call.1} parent=43 // pred_region
          %s262 = sand.u32 %s30, 1
          %s263 = scalar_lea.sflag [#allocation3], %s262
          %s264 = sand.u32 %s30, 1
          %s265 = smul.addr %s264, 8
          %s266 = scalar_lea.vmem [#allocation2], %s265
          %s268 = ssub.s32 128, 128
          %269 = vsyncadd %s263, %s268
          %s270 = smul.addr %s20, 128
          %s271 = scalar_lea.hbm %s0, %s270
          %s273 = sshll.u32 %s266, 4
          %s274 = int_to_ptr.vmem [resolvable:$true] %s273
          %276 = dma.hbm_to_vmem [thread:$0]  %s271, 128, %s274, %s263
        $region48: #{tpu_custom_call.1} parent=43 // pred_fallthru
          _
      $region44: #{tpu_custom_call.1} parent=5 // pred_fallthru
        _
      %p277 = scmp.le.s32.totalorder 1, %s20
      %p278 = scmp.lt.s32.totalorder %s20, 3
      %p279 = pnand %p277, %p278
      %p280 = pneg %p279
      // Predicated region
      $region49: #{tpu_custom_call.1} parent=5 // pred_check
        _
      $region50: #{tpu_custom_call.1} parent=5 // pred_check_branch
        %282 = sbr.rel (%p279) target = $region52
      $region51: #{tpu_custom_call.1} parent=5 // pred_region
        %s283 = ssub.s32 %s20, 1
        %s284 = sand.u32 %s33, 1
        %s285 = scalar_lea.sflag [#allocation3], %s284
        %s286 = sand.u32 %s33, 1
        %s287 = smul.addr %s286, 8
        %s288 = scalar_lea.vmem [#allocation2], %s287
        // Predicated region
        $region53: #{tpu_custom_call.1} parent=51 // pred_check
          %p289 = pneg %p46
        $region54: #{tpu_custom_call.1} parent=51 // pred_check_branch
          %291 = sbr.rel (%p289) target = $region56
        $region55: #{tpu_custom_call.1} parent=51 // pred_region
          %292 = dma.done %s285, 128
        $region56: #{tpu_custom_call.1} parent=51 // pred_fallthru
          _
        %s293 = sand.u32 %s33, 1
        %s294 = scalar_lea.sflag [#allocation3], %s293
        %s295 = sand.u32 %s33, 1
        %s296 = smul.addr %s295, 8
        %s297 = scalar_lea.vmem [#allocation2], %s296
        %p298 = pneg %p46
        %p299 = pneg %p43
        %p300 = pneg %p67
        %p301 = pneg %p64
        %p302 = pneg %p88
        %p303 = pneg %p85
        %p304 = pneg %p109
        %p305 = pneg %p106
        %p306 = pneg %p130
        %p307 = pneg %p127
        %p308 = pneg %p151
        %p309 = pneg %p148
        %p310 = pneg %p172
        %p311 = pneg %p169
        %p312 = pneg %p193
        %p313 = pneg %p190
        %p314 = pneg %p219
        %p315 = pneg %p216
        %s316 = sand.u32 %s206, 1
        %s317 = scalar_lea.sflag [#allocation4], %s316
        %s318 = sand.u32 %s206, 1
        %s319 = smul.addr %s318, 8
        %s320 = scalar_lea.vmem [#allocation5], %s319
        %v321 = vld [vmem:[%s288] sm:$0xff]
        %v322 = vld [vmem:[%s7] sm:$0x1]
        %v323 = vld [vmem:[%s7 + $0x1] sm:$0x1]
        %v324 = vld [vmem:[%s7 + $0x2] sm:$0x1]
        %v325 = vld [vmem:[%s7 + $0x3] sm:$0x1]
        %v326 = vld [vmem:[%s7 + $0x4] sm:$0x1]
        %v327 = vld [vmem:[%s7 + $0x5] sm:$0x1]
        %vm328 = vcmask 261120
        %v329 = vsel %vm328, %v321, 0.0
        %330 = vadd.xlane.f32.xlu0 %v329
        %v331 = vpop.xlane.xlu0 %330
        %v332 = vrcp.pop 32.0
        %v333 = vmul.f32 %v331, %v332
        %v334 = vsub.f32 %v321, %v333
        %v335 = vmul.f32 %v334, %v334
        %v336 = vsel %vm328, %v335, 0.0
        %337 = vadd.xlane.f32.xlu0 %v336
        %v338 = vpop.xlane.xlu0 %337
        %v339 = vmul.f32 %v338, %v332
        %v340 = vadd.f32 %v339, 1e-05
        %v341 = vrsqrt.pop %v340
        %v342 = vmul.f32 %v334, %v341
        %v343 = vlaneseq
        %v344 = vshrl.u32 %v343, 7
        %v345 = vsub.s32 0, %v344
        %v346 = vrot.slane %v324, %v345
        %v347 = vmul.f32 %v342, %v346
        %v348 = vlaneseq
        %v349 = vshrl.u32 %v348, 7
        %v350 = vsub.s32 0, %v349
        %v351 = vrot.slane %v325, %v350
        %v352 = vadd.f32 %v347, %v351
        %v353 = vld [vmem:[%s1] sm:$0xff]
        %v354 = vld [vmem:[%s1 + $0x8] sm:$0xff]
        %v355 = vld [vmem:[%s1 + $0x10] sm:$0xff]
        %v356 = vld [vmem:[%s1 + $0x18] sm:$0xff]
        %v357 = vld [vmem:[%s2] sm:$0x1]
        %v359 = vlaneseq
        %v360 = vshrl.u32 %v359, 7
        %v361 = vsub.s32 0, %v360
        %v362 = vrot.slane %v357, %v361
        %v365 = vsel %vm328, %v352, 0
        %367 = vmatprep.subr.mxu0 0.0
        %368 = vmatpush1.msra.mxu0 %v353
        %369 = vmatprep.subr.mxu0 0.0
        %370 = vmatpush1.msra.mxu0 %v354
        %371 = vmatprep.subr.mxu0 0.0
        %372 = vmatpush1.msra.mxu0 %v355
        %373 = vmatprep.subr.mxu0 0.0
        %374 = vmatpush1.msra.mxu0 %v356
        %375 = vmatprep.subr.mxu0 0.0
        %376 = vmatpush1.msra.mxu0 0.0
        %377 = vmatprep.subr.mxu0 0.0
        %378 = vmatpush1.msra.mxu0 0.0
        %379 = vmatprep.subr.mxu0 0.0
        %380 = vmatpush1.msra.mxu0 0.0
        %381 = vmatprep.subr.mxu0 0.0
        %382 = vmatpush1.msra.mxu0 0.0
        %383 = vmatprep.subr.mxu0 0.0
        %384 = vmatpush1.msra.mxu0 0.0
        %385 = vmatprep.subr.mxu0 0.0
        %386 = vmatpush1.msra.mxu0 0.0
        %387 = vmatprep.subr.mxu0 0.0
        %388 = vmatpush1.msra.mxu0 0.0
        %389 = vmatprep.subr.mxu0 0.0
        %390 = vmatpush1.msra.mxu0 0.0
        %391 = vmatprep.subr.mxu0 0.0
        %392 = vmatpush1.msra.mxu0 0.0
        %393 = vmatprep.subr.mxu0 0.0
        %394 = vmatpush1.msra.mxu0 0.0
        %395 = vmatprep.subr.mxu0 0.0
        %396 = vmatpush1.msra.mxu0 0.0
        %397 = vmatprep.subr.mxu0 0.0
        %398 = vmatpush1.msra.mxu0 0.0
        %399 = vmatprep.subr.mxu0 0.0
        %400 = vmatpush1.msra.mxu0 0.0
        %401 = vmatprep.subr.mxu0 0.0
        %402 = vmatpush1.msra.mxu0 0.0
        %403 = vmatprep.subr.mxu0 0.0
        %404 = vmatpush1.msra.mxu0 0.0
        %405 = vmatprep.subr.mxu0 0.0
        %406 = vmatpush1.msra.mxu0 0.0
        %407 = vmatprep.subr.mxu0 0.0
        %408 = vmatpush1.msra.mxu0 0.0
        %409 = vmatprep.subr.mxu0 0.0
        %410 = vmatpush1.msra.mxu0 0.0
        %411 = vmatprep.subr.mxu0 0.0
        %412 = vmatpush1.msra.mxu0 0.0
        %413 = vmatprep.subr.mxu0 0.0
        %414 = vmatpush1.msra.mxu0 0.0
        %415 = vmatprep.subr.mxu0 0.0
        %416 = vmatpush1.msra.mxu0 0.0
        %417 = vmatprep.subr.mxu0 0.0
        %418 = vmatpush1.msra.mxu0 0.0
        %419 = vmatprep.subr.mxu0 0.0
        %420 = vmatpush1.msra.mxu0 0.0
        %421 = vmatprep.subr.mxu0 0.0
        %422 = vmatpush1.msra.mxu0 0.0
        %423 = vmatprep.subr.mxu0 0.0
        %424 = vmatpush1.msra.mxu0 0.0
        %425 = vmatprep.subr.mxu0 0.0
        %426 = vmatpush1.msra.mxu0 0.0
        %427 = vmatprep.subr.mxu0 0.0
        %428 = vmatpush1.msra.mxu0 0.0
        %429 = vmatprep.subr.mxu0 0.0
        %430 = vmatpush1.msra.mxu0 0.0
        %431 = vmatprep.mubr.f32.mxu0 0.0
        %432 = vmatmul.mubr.f32.gmra.mrb[0].mxu0 %v365
        %v433 = vpop.f32.mrb[0].mxu0
        %v434 = vadd.f32 %v362, %v433
        %v435 = vpop.f32.mrb[0].mxu0
        %436 = vdwg.mxu0
        %438 = vrot.lane.b32.xlu0 %v434, 96
        %v439 = vpop.permute.xlu0 %438
        %vm440 = vcmask 64512
        %v441 = vsel %vm440, %v434, 0
        %v443 = vsel %vm440, %v439, 0
        %445 = vmatprep.subr.mxu0 0.0
        %446 = vmatpush1.xpose.msra.mxu0 %v443
        %447 = vmatprep.subr.mxu0 0.0
        %448 = vmatpush1.xpose.msra.mxu0 0.0
        %449 = vmatprep.subr.mxu0 0.0
        %450 = vmatpush1.xpose.msra.mxu0 0.0
        %451 = vmatprep.subr.mxu0 0.0
        %452 = vmatpush1.xpose.msra.mxu0 0.0
        %453 = vmatprep.subr.mxu0 0.0
        %454 = vmatpush1.xpose.msra.mxu0 0.0
        %455 = vmatprep.subr.mxu0 0.0
        %456 = vmatpush1.xpose.msra.mxu0 0.0
        %457 = vmatprep.subr.mxu0 0.0
        %458 = vmatpush1.xpose.msra.mxu0 0.0
        %459 = vmatprep.subr.mxu0 0.0
        %460 = vmatpush1.xpose.msra.mxu0 0.0
        %461 = vmatprep.subr.mxu0 0.0
        %462 = vmatpush1.xpose.msra.mxu0 0.0
        %463 = vmatprep.subr.mxu0 0.0
        %464 = vmatpush1.xpose.msra.mxu0 0.0
        %465 = vmatprep.subr.mxu0 0.0
        %466 = vmatpush1.xpose.msra.mxu0 0.0
        %467 = vmatprep.subr.mxu0 0.0
        %468 = vmatpush1.xpose.msra.mxu0 0.0
        %469 = vmatprep.subr.mxu0 0.0
        %470 = vmatpush1.xpose.msra.mxu0 0.0
        %471 = vmatprep.subr.mxu0 0.0
        %472 = vmatpush1.xpose.msra.mxu0 0.0
        %473 = vmatprep.subr.mxu0 0.0
        %474 = vmatpush1.xpose.msra.mxu0 0.0
        %475 = vmatprep.subr.mxu0 0.0
        %476 = vmatpush1.xpose.msra.mxu0 0.0
        %477 = vmatprep.subr.mxu0 0.0
        %478 = vmatpush1.xpose.msra.mxu0 0.0
        %479 = vmatprep.subr.mxu0 0.0
        %480 = vmatpush1.xpose.msra.mxu0 0.0
        %481 = vmatprep.subr.mxu0 0.0
        %482 = vmatpush1.xpose.msra.mxu0 0.0
        %483 = vmatprep.subr.mxu0 0.0
        %484 = vmatpush1.xpose.msra.mxu0 0.0
        %485 = vmatprep.subr.mxu0 0.0
        %486 = vmatpush1.xpose.msra.mxu0 0.0
        %487 = vmatprep.subr.mxu0 0.0
        %488 = vmatpush1.xpose.msra.mxu0 0.0
        %489 = vmatprep.subr.mxu0 0.0
        %490 = vmatpush1.xpose.msra.mxu0 0.0
        %491 = vmatprep.subr.mxu0 0.0
        %492 = vmatpush1.xpose.msra.mxu0 0.0
        %493 = vmatprep.subr.mxu0 0.0
        %494 = vmatpush1.xpose.msra.mxu0 0.0
        %495 = vmatprep.subr.mxu0 0.0
        %496 = vmatpush1.xpose.msra.mxu0 0.0
        %497 = vmatprep.subr.mxu0 0.0
        %498 = vmatpush1.xpose.msra.mxu0 0.0
        %499 = vmatprep.subr.mxu0 0.0
        %500 = vmatpush1.xpose.msra.mxu0 0.0
        %501 = vmatprep.subr.mxu0 0.0
        %502 = vmatpush1.xpose.msra.mxu0 0.0
        %503 = vmatprep.subr.mxu0 0.0
        %504 = vmatpush1.xpose.msra.mxu0 0.0
        %505 = vmatprep.subr.mxu0 0.0
        %506 = vmatpush1.xpose.msra.mxu0 0.0
        %507 = vmatprep.subr.mxu0 0.0
        %508 = vmatpush1.xpose.msra.mxu0 0.0
        %509 = vmatprep.mubr.f32.mxu0 0.0
        %510 = vmatmul.mubr.f32.gmra.mrb[0].mxu0 %v441
        %v511 = vpop.f32.mrb[0].mxu0
        %v512 = vadd.f32 0.0, %v511
        %v513 = vpop.f32.mrb[0].mxu0
        %514 = vdwg.mxu0
        %v515 = vsel %vm440, %v512, -inf
        %516 = vmax.xlane.f32.xlu0 %v515
        %v517 = vpop.xlane.xlu0 %516
        %v518 = vsub.f32 %v512, %v517
        %v519 = vmul.f32 %v518, 1.442695
        %v520 = vpow.pop %v519
        %v521 = vsel %vm440, %v520, 0.0
        %522 = vadd.xlane.f32.xlu0 %v521
        %v523 = vpop.xlane.xlu0 %522
        %v524 = vrcp.pop %v523
        %v525 = vmul.f32 %v520, %v524
        %526 = vrot.lane.b32.xlu0 %v434, 64
        %v527 = vpop.permute.xlu0 %526
        %v530 = vsel %vm440, %v525, 0
        %532 = vmatprep.subr.mxu0 0.0
        %533 = vmatpush1.msra.mxu0 %v527
        %534 = vmatprep.subr.mxu0 0.0
        %535 = vmatpush1.msra.mxu0 0.0
        %536 = vmatprep.subr.mxu0 0.0
        %537 = vmatpush1.msra.mxu0 0.0
        %538 = vmatprep.subr.mxu0 0.0
        %539 = vmatpush1.msra.mxu0 0.0
        %540 = vmatprep.subr.mxu0 0.0
        %541 = vmatpush1.msra.mxu0 0.0
        %542 = vmatprep.subr.mxu0 0.0
        %543 = vmatpush1.msra.mxu0 0.0
        %544 = vmatprep.subr.mxu0 0.0
        %545 = vmatpush1.msra.mxu0 0.0
        %546 = vmatprep.subr.mxu0 0.0
        %547 = vmatpush1.msra.mxu0 0.0
        %548 = vmatprep.subr.mxu0 0.0
        %549 = vmatpush1.msra.mxu0 0.0
        %550 = vmatprep.subr.mxu0 0.0
        %551 = vmatpush1.msra.mxu0 0.0
        %552 = vmatprep.subr.mxu0 0.0
        %553 = vmatpush1.msra.mxu0 0.0
        %554 = vmatprep.subr.mxu0 0.0
        %555 = vmatpush1.msra.mxu0 0.0
        %556 = vmatprep.subr.mxu0 0.0
        %557 = vmatpush1.msra.mxu0 0.0
        %558 = vmatprep.subr.mxu0 0.0
        %559 = vmatpush1.msra.mxu0 0.0
        %560 = vmatprep.subr.mxu0 0.0
        %561 = vmatpush1.msra.mxu0 0.0
        %562 = vmatprep.subr.mxu0 0.0
        %563 = vmatpush1.msra.mxu0 0.0
        %564 = vmatprep.subr.mxu0 0.0
        %565 = vmatpush1.msra.mxu0 0.0
        %566 = vmatprep.subr.mxu0 0.0
        %567 = vmatpush1.msra.mxu0 0.0
        %568 = vmatprep.subr.mxu0 0.0
        %569 = vmatpush1.msra.mxu0 0.0
        %570 = vmatprep.subr.mxu0 0.0
        %571 = vmatpush1.msra.mxu0 0.0
        %572 = vmatprep.subr.mxu0 0.0
        %573 = vmatpush1.msra.mxu0 0.0
        %574 = vmatprep.subr.mxu0 0.0
        %575 = vmatpush1.msra.mxu0 0.0
        %576 = vmatprep.subr.mxu0 0.0
        %577 = vmatpush1.msra.mxu0 0.0
        %578 = vmatprep.subr.mxu0 0.0
        %579 = vmatpush1.msra.mxu0 0.0
        %580 = vmatprep.subr.mxu0 0.0
        %581 = vmatpush1.msra.mxu0 0.0
        %582 = vmatprep.subr.mxu0 0.0
        %583 = vmatpush1.msra.mxu0 0.0
        %584 = vmatprep.subr.mxu0 0.0
        %585 = vmatpush1.msra.mxu0 0.0
        %586 = vmatprep.subr.mxu0 0.0
        %587 = vmatpush1.msra.mxu0 0.0
        %588 = vmatprep.subr.mxu0 0.0
        %589 = vmatpush1.msra.mxu0 0.0
        %590 = vmatprep.subr.mxu0 0.0
        %591 = vmatpush1.msra.mxu0 0.0
        %592 = vmatprep.subr.mxu0 0.0
        %593 = vmatpush1.msra.mxu0 0.0
        %594 = vmatprep.subr.mxu0 0.0
        %595 = vmatpush1.msra.mxu0 0.0
        %596 = vmatprep.mubr.f32.mxu0 0.0
        %597 = vmatmul.mubr.f32.gmra.mrb[0].mxu0 %v530
        %v598 = vpop.f32.mrb[0].mxu0
        %v599 = vadd.f32 0.0, %v598
        %v600 = vpop.f32.mrb[0].mxu0
        %601 = vdwg.mxu0
        %602 = vrot.lane.b32.xlu0 %v434, 120
        %v603 = vpop.permute.xlu0 %602
        %604 = vrot.lane.b32.xlu0 %v434, 88
        %v605 = vpop.permute.xlu0 %604
        %v606 = vsel %vm440, %v603, 0
        %v608 = vsel %vm440, %v605, 0
        %610 = vmatprep.subr.mxu0 0.0
        %611 = vmatpush1.xpose.msra.mxu0 %v608
        %612 = vmatprep.subr.mxu0 0.0
        %613 = vmatpush1.xpose.msra.mxu0 0.0
        %614 = vmatprep.subr.mxu0 0.0
        %615 = vmatpush1.xpose.msra.mxu0 0.0
        %616 = vmatprep.subr.mxu0 0.0
        %617 = vmatpush1.xpose.msra.mxu0 0.0
        %618 = vmatprep.subr.mxu0 0.0
        %619 = vmatpush1.xpose.msra.mxu0 0.0
        %620 = vmatprep.subr.mxu0 0.0
        %621 = vmatpush1.xpose.msra.mxu0 0.0
        %622 = vmatprep.subr.mxu0 0.0
        %623 = vmatpush1.xpose.msra.mxu0 0.0
        %624 = vmatprep.subr.mxu0 0.0
        %625 = vmatpush1.xpose.msra.mxu0 0.0
        %626 = vmatprep.subr.mxu0 0.0
        %627 = vmatpush1.xpose.msra.mxu0 0.0
        %628 = vmatprep.subr.mxu0 0.0
        %629 = vmatpush1.xpose.msra.mxu0 0.0
        %630 = vmatprep.subr.mxu0 0.0
        %631 = vmatpush1.xpose.msra.mxu0 0.0
        %632 = vmatprep.subr.mxu0 0.0
        %633 = vmatpush1.xpose.msra.mxu0 0.0
        %634 = vmatprep.subr.mxu0 0.0
        %635 = vmatpush1.xpose.msra.mxu0 0.0
        %636 = vmatprep.subr.mxu0 0.0
        %637 = vmatpush1.xpose.msra.mxu0 0.0
        %638 = vmatprep.subr.mxu0 0.0
        %639 = vmatpush1.xpose.msra.mxu0 0.0
        %640 = vmatprep.subr.mxu0 0.0
        %641 = vmatpush1.xpose.msra.mxu0 0.0
        %642 = vmatprep.subr.mxu0 0.0
        %643 = vmatpush1.xpose.msra.mxu0 0.0
        %644 = vmatprep.subr.mxu0 0.0
        %645 = vmatpush1.xpose.msra.mxu0 0.0
        %646 = vmatprep.subr.mxu0 0.0
        %647 = vmatpush1.xpose.msra.mxu0 0.0
        %648 = vmatprep.subr.mxu0 0.0
        %649 = vmatpush1.xpose.msra.mxu0 0.0
        %650 = vmatprep.subr.mxu0 0.0
        %651 = vmatpush1.xpose.msra.mxu0 0.0
        %652 = vmatprep.subr.mxu0 0.0
        %653 = vmatpush1.xpose.msra.mxu0 0.0
        %654 = vmatprep.subr.mxu0 0.0
        %655 = vmatpush1.xpose.msra.mxu0 0.0
        %656 = vmatprep.subr.mxu0 0.0
        %657 = vmatpush1.xpose.msra.mxu0 0.0
        %658 = vmatprep.subr.mxu0 0.0
        %659 = vmatpush1.xpose.msra.mxu0 0.0
        %660 = vmatprep.subr.mxu0 0.0
        %661 = vmatpush1.xpose.msra.mxu0 0.0
        %662 = vmatprep.subr.mxu0 0.0
        %663 = vmatpush1.xpose.msra.mxu0 0.0
        %664 = vmatprep.subr.mxu0 0.0
        %665 = vmatpush1.xpose.msra.mxu0 0.0
        %666 = vmatprep.subr.mxu0 0.0
        %667 = vmatpush1.xpose.msra.mxu0 0.0
        %668 = vmatprep.subr.mxu0 0.0
        %669 = vmatpush1.xpose.msra.mxu0 0.0
        %670 = vmatprep.subr.mxu0 0.0
        %671 = vmatpush1.xpose.msra.mxu0 0.0
        %672 = vmatprep.subr.mxu0 0.0
        %673 = vmatpush1.xpose.msra.mxu0 0.0
        %674 = vmatprep.mubr.f32.mxu0 0.0
        %675 = vmatmul.mubr.f32.gmra.mrb[0].mxu0 %v606
        %v676 = vpop.f32.mrb[0].mxu0
        %v677 = vadd.f32 0.0, %v676
        %v678 = vpop.f32.mrb[0].mxu0
        %679 = vdwg.mxu0
        %v680 = vsel %vm440, %v677, -inf
        %681 = vmax.xlane.f32.xlu0 %v680
        %v682 = vpop.xlane.xlu0 %681
        %v683 = vsub.f32 %v677, %v682
        %v684 = vmul.f32 %v683, 1.442695
        %v685 = vpow.pop %v684
        %v686 = vsel %vm440, %v685, 0.0
        %687 = vadd.xlane.f32.xlu0 %v686
        %v688 = vpop.xlane.xlu0 %687
        %v689 = vrcp.pop %v688
        %v690 = vmul.f32 %v685, %v689
        %691 = vrot.lane.b32.xlu0 %v434, 56
        %v692 = vpop.permute.xlu0 %691
        %v695 = vsel %vm440, %v690, 0
        %697 = vmatprep.subr.mxu0 0.0
        %698 = vmatpush1.msra.mxu0 %v692
        %699 = vmatprep.subr.mxu0 0.0
        %700 = vmatpush1.msra.mxu0 0.0
        %701 = vmatprep.subr.mxu0 0.0
        %702 = vmatpush1.msra.mxu0 0.0
        %703 = vmatprep.subr.mxu0 0.0
        %704 = vmatpush1.msra.mxu0 0.0
        %705 = vmatprep.subr.mxu0 0.0
        %706 = vmatpush1.msra.mxu0 0.0
        %707 = vmatprep.subr.mxu0 0.0
        %708 = vmatpush1.msra.mxu0 0.0
        %709 = vmatprep.subr.mxu0 0.0
        %710 = vmatpush1.msra.mxu0 0.0
        %711 = vmatprep.subr.mxu0 0.0
        %712 = vmatpush1.msra.mxu0 0.0
        %713 = vmatprep.subr.mxu0 0.0
        %714 = vmatpush1.msra.mxu0 0.0
        %715 = vmatprep.subr.mxu0 0.0
        %716 = vmatpush1.msra.mxu0 0.0
        %717 = vmatprep.subr.mxu0 0.0
        %718 = vmatpush1.msra.mxu0 0.0
        %719 = vmatprep.subr.mxu0 0.0
        %720 = vmatpush1.msra.mxu0 0.0
        %721 = vmatprep.subr.mxu0 0.0
        %722 = vmatpush1.msra.mxu0 0.0
        %723 = vmatprep.subr.mxu0 0.0
        %724 = vmatpush1.msra.mxu0 0.0
        %725 = vmatprep.subr.mxu0 0.0
        %726 = vmatpush1.msra.mxu0 0.0
        %727 = vmatprep.subr.mxu0 0.0
        %728 = vmatpush1.msra.mxu0 0.0
        %729 = vmatprep.subr.mxu0 0.0
        %730 = vmatpush1.msra.mxu0 0.0
        %731 = vmatprep.subr.mxu0 0.0
        %732 = vmatpush1.msra.mxu0 0.0
        %733 = vmatprep.subr.mxu0 0.0
        %734 = vmatpush1.msra.mxu0 0.0
        %735 = vmatprep.subr.mxu0 0.0
        %736 = vmatpush1.msra.mxu0 0.0
        %737 = vmatprep.subr.mxu0 0.0
        %738 = vmatpush1.msra.mxu0 0.0
        %739 = vmatprep.subr.mxu0 0.0
        %740 = vmatpush1.msra.mxu0 0.0
        %741 = vmatprep.subr.mxu0 0.0
        %742 = vmatpush1.msra.mxu0 0.0
        %743 = vmatprep.subr.mxu0 0.0
        %744 = vmatpush1.msra.mxu0 0.0
        %745 = vmatprep.subr.mxu0 0.0
        %746 = vmatpush1.msra.mxu0 0.0
        %747 = vmatprep.subr.mxu0 0.0
        %748 = vmatpush1.msra.mxu0 0.0
        %749 = vmatprep.subr.mxu0 0.0
        %750 = vmatpush1.msra.mxu0 0.0
        %751 = vmatprep.subr.mxu0 0.0
        %752 = vmatpush1.msra.mxu0 0.0
        %753 = vmatprep.subr.mxu0 0.0
        %754 = vmatpush1.msra.mxu0 0.0
        %755 = vmatprep.subr.mxu0 0.0
        %756 = vmatpush1.msra.mxu0 0.0
        %757 = vmatprep.subr.mxu0 0.0
        %758 = vmatpush1.msra.mxu0 0.0
        %759 = vmatprep.subr.mxu0 0.0
        %760 = vmatpush1.msra.mxu0 0.0
        %761 = vmatprep.mubr.f32.mxu0 0.0
        %762 = vmatmul.mubr.f32.gmra.mrb[0].mxu0 %v695
        %v763 = vpop.f32.mrb[0].mxu0
        %v764 = vadd.f32 0.0, %v763
        %v765 = vpop.f32.mrb[0].mxu0
        %766 = vdwg.mxu0
        %767 = vrot.lane.b32.xlu0 %v434, 112
        %v768 = vpop.permute.xlu0 %767
        %769 = vrot.lane.b32.xlu0 %v434, 80
        %v770 = vpop.permute.xlu0 %769
        %v771 = vsel %vm440, %v768, 0
        %v773 = vsel %vm440, %v770, 0
        %775 = vmatprep.subr.mxu0 0.0
        %776 = vmatpush1.xpose.msra.mxu0 %v773
        %777 = vmatprep.subr.mxu0 0.0
        %778 = vmatpush1.xpose.msra.mxu0 0.0
        %779 = vmatprep.subr.mxu0 0.0
        %780 = vmatpush1.xpose.msra.mxu0 0.0
        %781 = vmatprep.subr.mxu0 0.0
        %782 = vmatpush1.xpose.msra.mxu0 0.0
        %783 = vmatprep.subr.mxu0 0.0
        %784 = vmatpush1.xpose.msra.mxu0 0.0
        %785 = vmatprep.subr.mxu0 0.0
        %786 = vmatpush1.xpose.msra.mxu0 0.0
        %787 = vmatprep.subr.mxu0 0.0
        %788 = vmatpush1.xpose.msra.mxu0 0.0
        %789 = vmatprep.subr.mxu0 0.0
        %790 = vmatpush1.xpose.msra.mxu0 0.0
        %791 = vmatprep.subr.mxu0 0.0
        %792 = vmatpush1.xpose.msra.mxu0 0.0
        %793 = vmatprep.subr.mxu0 0.0
        %794 = vmatpush1.xpose.msra.mxu0 0.0
        %795 = vmatprep.subr.mxu0 0.0
        %796 = vmatpush1.xpose.msra.mxu0 0.0
        %797 = vmatprep.subr.mxu0 0.0
        %798 = vmatpush1.xpose.msra.mxu0 0.0
        %799 = vmatprep.subr.mxu0 0.0
        %800 = vmatpush1.xpose.msra.mxu0 0.0
        %801 = vmatprep.subr.mxu0 0.0
        %802 = vmatpush1.xpose.msra.mxu0 0.0
        %803 = vmatprep.subr.mxu0 0.0
        %804 = vmatpush1.xpose.msra.mxu0 0.0
        %805 = vmatprep.subr.mxu0 0.0
        %806 = vmatpush1.xpose.msra.mxu0 0.0
        %807 = vmatprep.subr.mxu0 0.0
        %808 = vmatpush1.xpose.msra.mxu0 0.0
        %809 = vmatprep.subr.mxu0 0.0
        %810 = vmatpush1.xpose.msra.mxu0 0.0
        %811 = vmatprep.subr.mxu0 0.0
        %812 = vmatpush1.xpose.msra.mxu0 0.0
        %813 = vmatprep.subr.mxu0 0.0
        %814 = vmatpush1.xpose.msra.mxu0 0.0
        %815 = vmatprep.subr.mxu0 0.0
        %816 = vmatpush1.xpose.msra.mxu0 0.0
        %817 = vmatprep.subr.mxu0 0.0
        %818 = vmatpush1.xpose.msra.mxu0 0.0
        %819 = vmatprep.subr.mxu0 0.0
        %820 = vmatpush1.xpose.msra.mxu0 0.0
        %821 = vmatprep.subr.mxu0 0.0
        %822 = vmatpush1.xpose.msra.mxu0 0.0
        %823 = vmatprep.subr.mxu0 0.0
        %824 = vmatpush1.xpose.msra.mxu0 0.0
        %825 = vmatprep.subr.mxu0 0.0
        %826 = vmatpush1.xpose.msra.mxu0 0.0
        %827 = vmatprep.subr.mxu0 0.0
        %828 = vmatpush1.xpose.msra.mxu0 0.0
        %829 = vmatprep.subr.mxu0 0.0
        %830 = vmatpush1.xpose.msra.mxu0 0.0
        %831 = vmatprep.subr.mxu0 0.0
        %832 = vmatpush1.xpose.msra.mxu0 0.0
        %833 = vmatprep.subr.mxu0 0.0
        %834 = vmatpush1.xpose.msra.mxu0 0.0
        %835 = vmatprep.subr.mxu0 0.0
        %836 = vmatpush1.xpose.msra.mxu0 0.0
        %837 = vmatprep.subr.mxu0 0.0
        %838 = vmatpush1.xpose.msra.mxu0 0.0
        %839 = vmatprep.mubr.f32.mxu0 0.0
        %840 = vmatmul.mubr.f32.gmra.mrb[0].mxu0 %v771
        %v841 = vpop.f32.mrb[0].mxu0
        %v842 = vadd.f32 0.0, %v841
        %v843 = vpop.f32.mrb[0].mxu0
        %844 = vdwg.mxu0
        %v845 = vsel %vm440, %v842, -inf
        %846 = vmax.xlane.f32.xlu0 %v845
        %v847 = vpop.xlane.xlu0 %846
        %v848 = vsub.f32 %v842, %v847
        %v849 = vmul.f32 %v848, 1.442695
        %v850 = vpow.pop %v849
        %v851 = vsel %vm440, %v850, 0.0
        %852 = vadd.xlane.f32.xlu0 %v851
        %v853 = vpop.xlane.xlu0 %852
        %v854 = vrcp.pop %v853
        %v855 = vmul.f32 %v850, %v854
        %856 = vrot.lane.b32.xlu0 %v434, 48
        %v857 = vpop.permute.xlu0 %856
        %v860 = vsel %vm440, %v855, 0
        %862 = vmatprep.subr.mxu0 0.0
        %863 = vmatpush1.msra.mxu0 %v857
        %864 = vmatprep.subr.mxu0 0.0
        %865 = vmatpush1.msra.mxu0 0.0
        %866 = vmatprep.subr.mxu0 0.0
        %867 = vmatpush1.msra.mxu0 0.0
        %868 = vmatprep.subr.mxu0 0.0
        %869 = vmatpush1.msra.mxu0 0.0
        %870 = vmatprep.subr.mxu0 0.0
        %871 = vmatpush1.msra.mxu0 0.0
        %872 = vmatprep.subr.mxu0 0.0
        %873 = vmatpush1.msra.mxu0 0.0
        %874 = vmatprep.subr.mxu0 0.0
        %875 = vmatpush1.msra.mxu0 0.0
        %876 = vmatprep.subr.mxu0 0.0
        %877 = vmatpush1.msra.mxu0 0.0
        %878 = vmatprep.subr.mxu0 0.0
        %879 = vmatpush1.msra.mxu0 0.0
        %880 = vmatprep.subr.mxu0 0.0
        %881 = vmatpush1.msra.mxu0 0.0
        %882 = vmatprep.subr.mxu0 0.0
        %883 = vmatpush1.msra.mxu0 0.0
        %884 = vmatprep.subr.mxu0 0.0
        %885 = vmatpush1.msra.mxu0 0.0
        %886 = vmatprep.subr.mxu0 0.0
        %887 = vmatpush1.msra.mxu0 0.0
        %888 = vmatprep.subr.mxu0 0.0
        %889 = vmatpush1.msra.mxu0 0.0
        %890 = vmatprep.subr.mxu0 0.0
        %891 = vmatpush1.msra.mxu0 0.0
        %892 = vmatprep.subr.mxu0 0.0
        %893 = vmatpush1.msra.mxu0 0.0
        %894 = vmatprep.subr.mxu0 0.0
        %895 = vmatpush1.msra.mxu0 0.0
        %896 = vmatprep.subr.mxu0 0.0
        %897 = vmatpush1.msra.mxu0 0.0
        %898 = vmatprep.subr.mxu0 0.0
        %899 = vmatpush1.msra.mxu0 0.0
        %900 = vmatprep.subr.mxu0 0.0
        %901 = vmatpush1.msra.mxu0 0.0
        %902 = vmatprep.subr.mxu0 0.0
        %903 = vmatpush1.msra.mxu0 0.0
        %904 = vmatprep.subr.mxu0 0.0
        %905 = vmatpush1.msra.mxu0 0.0
        %906 = vmatprep.subr.mxu0 0.0
        %907 = vmatpush1.msra.mxu0 0.0
        %908 = vmatprep.subr.mxu0 0.0
        %909 = vmatpush1.msra.mxu0 0.0
        %910 = vmatprep.subr.mxu0 0.0
        %911 = vmatpush1.msra.mxu0 0.0
        %912 = vmatprep.subr.mxu0 0.0
        %913 = vmatpush1.msra.mxu0 0.0
        %914 = vmatprep.subr.mxu0 0.0
        %915 = vmatpush1.msra.mxu0 0.0
        %916 = vmatprep.subr.mxu0 0.0
        %917 = vmatpush1.msra.mxu0 0.0
        %918 = vmatprep.subr.mxu0 0.0
        %919 = vmatpush1.msra.mxu0 0.0
        %920 = vmatprep.subr.mxu0 0.0
        %921 = vmatpush1.msra.mxu0 0.0
        %922 = vmatprep.subr.mxu0 0.0
        %923 = vmatpush1.msra.mxu0 0.0
        %924 = vmatprep.subr.mxu0 0.0
        %925 = vmatpush1.msra.mxu0 0.0
        %926 = vmatprep.mubr.f32.mxu0 0.0
        %927 = vmatmul.mubr.f32.gmra.mrb[0].mxu0 %v860
        %v928 = vpop.f32.mrb[0].mxu0
        %v929 = vadd.f32 0.0, %v928
        %v930 = vpop.f32.mrb[0].mxu0
        %931 = vdwg.mxu0
        %932 = vrot.lane.b32.xlu0 %v434, 104
        %v933 = vpop.permute.xlu0 %932
        %934 = vrot.lane.b32.xlu0 %v434, 72
        %v935 = vpop.permute.xlu0 %934
        %v936 = vsel %vm440, %v933, 0
        %v938 = vsel %vm440, %v935, 0
        %940 = vmatprep.subr.mxu0 0.0
        %941 = vmatpush1.xpose.msra.mxu0 %v938
        %942 = vmatprep.subr.mxu0 0.0
        %943 = vmatpush1.xpose.msra.mxu0 0.0
        %944 = vmatprep.subr.mxu0 0.0
        %945 = vmatpush1.xpose.msra.mxu0 0.0
        %946 = vmatprep.subr.mxu0 0.0
        %947 = vmatpush1.xpose.msra.mxu0 0.0
        %948 = vmatprep.subr.mxu0 0.0
        %949 = vmatpush1.xpose.msra.mxu0 0.0
        %950 = vmatprep.subr.mxu0 0.0
        %951 = vmatpush1.xpose.msra.mxu0 0.0
        %952 = vmatprep.subr.mxu0 0.0
        %953 = vmatpush1.xpose.msra.mxu0 0.0
        %954 = vmatprep.subr.mxu0 0.0
        %955 = vmatpush1.xpose.msra.mxu0 0.0
        %956 = vmatprep.subr.mxu0 0.0
        %957 = vmatpush1.xpose.msra.mxu0 0.0
        %958 = vmatprep.subr.mxu0 0.0
        %959 = vmatpush1.xpose.msra.mxu0 0.0
        %960 = vmatprep.subr.mxu0 0.0
        %961 = vmatpush1.xpose.msra.mxu0 0.0
        %962 = vmatprep.subr.mxu0 0.0
        %963 = vmatpush1.xpose.msra.mxu0 0.0
        %964 = vmatprep.subr.mxu0 0.0
        %965 = vmatpush1.xpose.msra.mxu0 0.0
        %966 = vmatprep.subr.mxu0 0.0
        %967 = vmatpush1.xpose.msra.mxu0 0.0
        %968 = vmatprep.subr.mxu0 0.0
        %969 = vmatpush1.xpose.msra.mxu0 0.0
        %970 = vmatprep.subr.mxu0 0.0
        %971 = vmatpush1.xpose.msra.mxu0 0.0
        %972 = vmatprep.subr.mxu0 0.0
        %973 = vmatpush1.xpose.msra.mxu0 0.0
        %974 = vmatprep.subr.mxu0 0.0
        %975 = vmatpush1.xpose.msra.mxu0 0.0
        %976 = vmatprep.subr.mxu0 0.0
        %977 = vmatpush1.xpose.msra.mxu0 0.0
        %978 = vmatprep.subr.mxu0 0.0
        %979 = vmatpush1.xpose.msra.mxu0 0.0
        %980 = vmatprep.subr.mxu0 0.0
        %981 = vmatpush1.xpose.msra.mxu0 0.0
        %982 = vmatprep.subr.mxu0 0.0
        %983 = vmatpush1.xpose.msra.mxu0 0.0
        %984 = vmatprep.subr.mxu0 0.0
        %985 = vmatpush1.xpose.msra.mxu0 0.0
        %986 = vmatprep.subr.mxu0 0.0
        %987 = vmatpush1.xpose.msra.mxu0 0.0
        %988 = vmatprep.subr.mxu0 0.0
        %989 = vmatpush1.xpose.msra.mxu0 0.0
        %990 = vmatprep.subr.mxu0 0.0
        %991 = vmatpush1.xpose.msra.mxu0 0.0
        %992 = vmatprep.subr.mxu0 0.0
        %993 = vmatpush1.xpose.msra.mxu0 0.0
        %994 = vmatprep.subr.mxu0 0.0
        %995 = vmatpush1.xpose.msra.mxu0 0.0
        %996 = vmatprep.subr.mxu0 0.0
        %997 = vmatpush1.xpose.msra.mxu0 0.0
        %998 = vmatprep.subr.mxu0 0.0
        %999 = vmatpush1.xpose.msra.mxu0 0.0
        %1000 = vmatprep.subr.mxu0 0.0
        %1001 = vmatpush1.xpose.msra.mxu0 0.0
        %1002 = vmatprep.subr.mxu0 0.0
        %1003 = vmatpush1.xpose.msra.mxu0 0.0
        %1004 = vmatprep.mubr.f32.mxu0 0.0
        %1005 = vmatmul.mubr.f32.gmra.mrb[0].mxu0 %v936
        %v1006 = vpop.f32.mrb[0].mxu0
        %v1007 = vadd.f32 0.0, %v1006
        %v1008 = vpop.f32.mrb[0].mxu0
        %1009 = vdwg.mxu0
        %v1010 = vsel %vm440, %v1007, -inf
        %1011 = vmax.xlane.f32.xlu0 %v1010
        %v1012 = vpop.xlane.xlu0 %1011
        %v1013 = vsub.f32 %v1007, %v1012
        %v1014 = vmul.f32 %v1013, 1.442695
        %v1015 = vpow.pop %v1014
        %v1016 = vsel %vm440, %v1015, 0.0
        %1017 = vadd.xlane.f32.xlu0 %v1016
        %v1018 = vpop.xlane.xlu0 %1017
        %v1019 = vrcp.pop %v1018
        %v1020 = vmul.f32 %v1015, %v1019
        %1021 = vrot.lane.b32.xlu0 %v434, 40
        %v1022 = vpop.permute.xlu0 %1021
        %v1025 = vsel %vm440, %v1020, 0
        %1027 = vmatprep.subr.mxu0 0.0
        %1028 = vmatpush1.msra.mxu0 %v1022
        %1029 = vmatprep.subr.mxu0 0.0
        %1030 = vmatpush1.msra.mxu0 0.0
        %1031 = vmatprep.subr.mxu0 0.0
        %1032 = vmatpush1.msra.mxu0 0.0
        %1033 = vmatprep.subr.mxu0 0.0
        %1034 = vmatpush1.msra.mxu0 0.0
        %1035 = vmatprep.subr.mxu0 0.0
        %1036 = vmatpush1.msra.mxu0 0.0
        %1037 = vmatprep.subr.mxu0 0.0
        %1038 = vmatpush1.msra.mxu0 0.0
        %1039 = vmatprep.subr.mxu0 0.0
        %1040 = vmatpush1.msra.mxu0 0.0
        %1041 = vmatprep.subr.mxu0 0.0
        %1042 = vmatpush1.msra.mxu0 0.0
        %1043 = vmatprep.subr.mxu0 0.0
        %1044 = vmatpush1.msra.mxu0 0.0
        %1045 = vmatprep.subr.mxu0 0.0
        %1046 = vmatpush1.msra.mxu0 0.0
        %1047 = vmatprep.subr.mxu0 0.0
        %1048 = vmatpush1.msra.mxu0 0.0
        %1049 = vmatprep.subr.mxu0 0.0
        %1050 = vmatpush1.msra.mxu0 0.0
        %1051 = vmatprep.subr.mxu0 0.0
        %1052 = vmatpush1.msra.mxu0 0.0
        %1053 = vmatprep.subr.mxu0 0.0
        %1054 = vmatpush1.msra.mxu0 0.0
        %1055 = vmatprep.subr.mxu0 0.0
        %1056 = vmatpush1.msra.mxu0 0.0
        %1057 = vmatprep.subr.mxu0 0.0
        %1058 = vmatpush1.msra.mxu0 0.0
        %1059 = vmatprep.subr.mxu0 0.0
        %1060 = vmatpush1.msra.mxu0 0.0
        %1061 = vmatprep.subr.mxu0 0.0
        %1062 = vmatpush1.msra.mxu0 0.0
        %1063 = vmatprep.subr.mxu0 0.0
        %1064 = vmatpush1.msra.mxu0 0.0
        %1065 = vmatprep.subr.mxu0 0.0
        %1066 = vmatpush1.msra.mxu0 0.0
        %1067 = vmatprep.subr.mxu0 0.0
        %1068 = vmatpush1.msra.mxu0 0.0
        %1069 = vmatprep.subr.mxu0 0.0
        %1070 = vmatpush1.msra.mxu0 0.0
        %1071 = vmatprep.subr.mxu0 0.0
        %1072 = vmatpush1.msra.mxu0 0.0
        %1073 = vmatprep.subr.mxu0 0.0
        %1074 = vmatpush1.msra.mxu0 0.0
        %1075 = vmatprep.subr.mxu0 0.0
        %1076 = vmatpush1.msra.mxu0 0.0
        %1077 = vmatprep.subr.mxu0 0.0
        %1078 = vmatpush1.msra.mxu0 0.0
        %1079 = vmatprep.subr.mxu0 0.0
        %1080 = vmatpush1.msra.mxu0 0.0
        %1081 = vmatprep.subr.mxu0 0.0
        %1082 = vmatpush1.msra.mxu0 0.0
        %1083 = vmatprep.subr.mxu0 0.0
        %1084 = vmatpush1.msra.mxu0 0.0
        %1085 = vmatprep.subr.mxu0 0.0
        %1086 = vmatpush1.msra.mxu0 0.0
        %1087 = vmatprep.subr.mxu0 0.0
        %1088 = vmatpush1.msra.mxu0 0.0
        %1089 = vmatprep.subr.mxu0 0.0
        %1090 = vmatpush1.msra.mxu0 0.0
        %1091 = vmatprep.mubr.f32.mxu0 0.0
        %1092 = vmatmul.mubr.f32.gmra.mrb[0].mxu0 %v1025
        %v1093 = vpop.f32.mrb[0].mxu0
        %v1094 = vadd.f32 0.0, %v1093
        %v1095 = vpop.f32.mrb[0].mxu0
        %1096 = vdwg.mxu0
        %1098 = vrot.lane.b32.xlu0 %v764, 8
        %v1099 = vpop.permute.xlu0 %1098
        %1102 = vrot.lane.b32.xlu0 %v929, 16
        %v1103 = vpop.permute.xlu0 %1102
        %1106 = vrot.lane.b32.xlu0 %v1094, 24
        %v1107 = vpop.permute.xlu0 %1106
        %v1109 = vsel %vm440, %v599, %v1099
        %vm1110 = vcmask 130048
        %v1111 = vsel %vm1110, %v1109, %v1103
        %vm1112 = vcmask 195584
        %v1113 = vsel %vm1112, %v1111, %v1107
        %v1114 = vld [vmem:[%s3] sm:$0xff]
        %v1115 = vld [vmem:[%s3 + $0x8] sm:$0xff]
        %v1116 = vld [vmem:[%s3 + $0x10] sm:$0xff]
        %v1117 = vld [vmem:[%s3 + $0x18] sm:$0xff]
        %v1118 = vlaneseq
        %v1119 = vshrl.u32 %v1118, 7
        %v1120 = vsub.s32 0, %v1119
        %v1121 = vrot.slane %v322, %v1120
        %v1123 = vsel %vm328, %v1113, 0
        %1125 = vmatprep.subr.mxu0 0.0
        %1126 = vmatpush1.msra.mxu0 %v1114
        %1127 = vmatprep.subr.mxu0 0.0
        %1128 = vmatpush1.msra.mxu0 %v1115
        %1129 = vmatprep.subr.mxu0 0.0
        %1130 = vmatpush1.msra.mxu0 %v1116
        %1131 = vmatprep.subr.mxu0 0.0
        %1132 = vmatpush1.msra.mxu0 %v1117
        %1133 = vmatprep.subr.mxu0 0.0
        %1134 = vmatpush1.msra.mxu0 0.0
        %1135 = vmatprep.subr.mxu0 0.0
        %1136 = vmatpush1.msra.mxu0 0.0
        %1137 = vmatprep.subr.mxu0 0.0
        %1138 = vmatpush1.msra.mxu0 0.0
        %1139 = vmatprep.subr.mxu0 0.0
        %1140 = vmatpush1.msra.mxu0 0.0
        %1141 = vmatprep.subr.mxu0 0.0
        %1142 = vmatpush1.msra.mxu0 0.0
        %1143 = vmatprep.subr.mxu0 0.0
        %1144 = vmatpush1.msra.mxu0 0.0
        %1145 = vmatprep.subr.mxu0 0.0
        %1146 = vmatpush1.msra.mxu0 0.0
        %1147 = vmatprep.subr.mxu0 0.0
        %1148 = vmatpush1.msra.mxu0 0.0
        %1149 = vmatprep.subr.mxu0 0.0
        %1150 = vmatpush1.msra.mxu0 0.0
        %1151 = vmatprep.subr.mxu0 0.0
        %1152 = vmatpush1.msra.mxu0 0.0
        %1153 = vmatprep.subr.mxu0 0.0
        %1154 = vmatpush1.msra.mxu0 0.0
        %1155 = vmatprep.subr.mxu0 0.0
        %1156 = vmatpush1.msra.mxu0 0.0
        %1157 = vmatprep.subr.mxu0 0.0
        %1158 = vmatpush1.msra.mxu0 0.0
        %1159 = vmatprep.subr.mxu0 0.0
        %1160 = vmatpush1.msra.mxu0 0.0
        %1161 = vmatprep.subr.mxu0 0.0
        %1162 = vmatpush1.msra.mxu0 0.0
        %1163 = vmatprep.subr.mxu0 0.0
        %1164 = vmatpush1.msra.mxu0 0.0
        %1165 = vmatprep.subr.mxu0 0.0
        %1166 = vmatpush1.msra.mxu0 0.0
        %1167 = vmatprep.subr.mxu0 0.0
        %1168 = vmatpush1.msra.mxu0 0.0
        %1169 = vmatprep.subr.mxu0 0.0
        %1170 = vmatpush1.msra.mxu0 0.0
        %1171 = vmatprep.subr.mxu0 0.0
        %1172 = vmatpush1.msra.mxu0 0.0
        %1173 = vmatprep.subr.mxu0 0.0
        %1174 = vmatpush1.msra.mxu0 0.0
        %1175 = vmatprep.subr.mxu0 0.0
        %1176 = vmatpush1.msra.mxu0 0.0
        %1177 = vmatprep.subr.mxu0 0.0
        %1178 = vmatpush1.msra.mxu0 0.0
        %1179 = vmatprep.subr.mxu0 0.0
        %1180 = vmatpush1.msra.mxu0 0.0
        %1181 = vmatprep.subr.mxu0 0.0
        %1182 = vmatpush1.msra.mxu0 0.0
        %1183 = vmatprep.subr.mxu0 0.0
        %1184 = vmatpush1.msra.mxu0 0.0
        %1185 = vmatprep.subr.mxu0 0.0
        %1186 = vmatpush1.msra.mxu0 0.0
        %1187 = vmatprep.subr.mxu0 0.0
        %1188 = vmatpush1.msra.mxu0 0.0
        %1189 = vmatprep.mubr.f32.mxu0 0.0
        %1190 = vmatmul.mubr.f32.gmra.mrb[0].mxu0 %v1123
        %v1191 = vpop.f32.mrb[0].mxu0
        %v1192 = vadd.f32 %v1121, %v1191
        %v1193 = vpop.f32.mrb[0].mxu0
        %1194 = vdwg.mxu0
        %v1195 = vadd.f32 %v1192, %v321
        %v1196 = vsel %vm328, %v1195, 0.0
        %1197 = vadd.xlane.f32.xlu0 %v1196
        %v1198 = vpop.xlane.xlu0 %1197
        %v1199 = vmul.f32 %v1198, %v332
        %v1200 = vsub.f32 %v1195, %v1199
        %v1201 = vmul.f32 %v1200, %v1200
        %v1202 = vsel %vm328, %v1201, 0.0
        %1203 = vadd.xlane.f32.xlu0 %v1202
        %v1204 = vpop.xlane.xlu0 %1203
        %v1205 = vmul.f32 %v1204, %v332
        %v1206 = vadd.f32 %v1205, 1e-05
        %v1207 = vrsqrt.pop %v1206
        %v1208 = vmul.f32 %v1200, %v1207
        %v1209 = vlaneseq
        %v1210 = vshrl.u32 %v1209, 7
        %v1211 = vsub.s32 0, %v1210
        %v1212 = vrot.slane %v326, %v1211
        %v1213 = vmul.f32 %v1208, %v1212
        %v1214 = vlaneseq
        %v1215 = vshrl.u32 %v1214, 7
        %v1216 = vsub.s32 0, %v1215
        %v1217 = vrot.slane %v327, %v1216
        %v1218 = vadd.f32 %v1213, %v1217
        %v1219 = vld [vmem:[%s4] sm:$0xff]
        %v1220 = vld [vmem:[%s4 + $0x8] sm:$0xff]
        %v1221 = vld [vmem:[%s4 + $0x10] sm:$0xff]
        %v1222 = vld [vmem:[%s4 + $0x18] sm:$0xff]
        %v1223 = vld [vmem:[%s5] sm:$0x1]
        %v1225 = vlaneseq
        %v1226 = vshrl.u32 %v1225, 7
        %v1227 = vsub.s32 0, %v1226
        %v1228 = vrot.slane %v1223, %v1227
        %v1231 = vsel %vm328, %v1218, 0
        %1233 = vmatprep.subr.mxu0 0.0
        %1234 = vmatpush1.msra.mxu0 %v1219
        %1235 = vmatprep.subr.mxu0 0.0
        %1236 = vmatpush1.msra.mxu0 %v1220
        %1237 = vmatprep.subr.mxu0 0.0
        %1238 = vmatpush1.msra.mxu0 %v1221
        %1239 = vmatprep.subr.mxu0 0.0
        %1240 = vmatpush1.msra.mxu0 %v1222
        %1241 = vmatprep.subr.mxu0 0.0
        %1242 = vmatpush1.msra.mxu0 0.0
        %1243 = vmatprep.subr.mxu0 0.0
        %1244 = vmatpush1.msra.mxu0 0.0
        %1245 = vmatprep.subr.mxu0 0.0
        %1246 = vmatpush1.msra.mxu0 0.0
        %1247 = vmatprep.subr.mxu0 0.0
        %1248 = vmatpush1.msra.mxu0 0.0
        %1249 = vmatprep.subr.mxu0 0.0
        %1250 = vmatpush1.msra.mxu0 0.0
        %1251 = vmatprep.subr.mxu0 0.0
        %1252 = vmatpush1.msra.mxu0 0.0
        %1253 = vmatprep.subr.mxu0 0.0
        %1254 = vmatpush1.msra.mxu0 0.0
        %1255 = vmatprep.subr.mxu0 0.0
        %1256 = vmatpush1.msra.mxu0 0.0
        %1257 = vmatprep.subr.mxu0 0.0
        %1258 = vmatpush1.msra.mxu0 0.0
        %1259 = vmatprep.subr.mxu0 0.0
        %1260 = vmatpush1.msra.mxu0 0.0
        %1261 = vmatprep.subr.mxu0 0.0
        %1262 = vmatpush1.msra.mxu0 0.0
        %1263 = vmatprep.subr.mxu0 0.0
        %1264 = vmatpush1.msra.mxu0 0.0
        %1265 = vmatprep.subr.mxu0 0.0
        %1266 = vmatpush1.msra.mxu0 0.0
        %1267 = vmatprep.subr.mxu0 0.0
        %1268 = vmatpush1.msra.mxu0 0.0
        %1269 = vmatprep.subr.mxu0 0.0
        %1270 = vmatpush1.msra.mxu0 0.0
        %1271 = vmatprep.subr.mxu0 0.0
        %1272 = vmatpush1.msra.mxu0 0.0
        %1273 = vmatprep.subr.mxu0 0.0
        %1274 = vmatpush1.msra.mxu0 0.0
        %1275 = vmatprep.subr.mxu0 0.0
        %1276 = vmatpush1.msra.mxu0 0.0
        %1277 = vmatprep.subr.mxu0 0.0
        %1278 = vmatpush1.msra.mxu0 0.0
        %1279 = vmatprep.subr.mxu0 0.0
        %1280 = vmatpush1.msra.mxu0 0.0
        %1281 = vmatprep.subr.mxu0 0.0
        %1282 = vmatpush1.msra.mxu0 0.0
        %1283 = vmatprep.subr.mxu0 0.0
        %1284 = vmatpush1.msra.mxu0 0.0
        %1285 = vmatprep.subr.mxu0 0.0
        %1286 = vmatpush1.msra.mxu0 0.0
        %1287 = vmatprep.subr.mxu0 0.0
        %1288 = vmatpush1.msra.mxu0 0.0
        %1289 = vmatprep.subr.mxu0 0.0
        %1290 = vmatpush1.msra.mxu0 0.0
        %1291 = vmatprep.subr.mxu0 0.0
        %1292 = vmatpush1.msra.mxu0 0.0
        %1293 = vmatprep.subr.mxu0 0.0
        %1294 = vmatpush1.msra.mxu0 0.0
        %1295 = vmatprep.subr.mxu0 0.0
        %1296 = vmatpush1.msra.mxu0 0.0
        %1297 = vmatprep.mubr.f32.mxu0 0.0
        %1298 = vmatmul.mubr.f32.gmra.mrb[0].mxu0 %v1231
        %v1299 = vpop.f32.mrb[0].mxu0
        %v1300 = vadd.f32 %v1228, %v1299
        %v1301 = vpop.f32.mrb[0].mxu0
        %1302 = vdwg.mxu0
        %v1303 = vmul.f32 %v1300, 0.5
        %v1304 = vmul.f32 %v1300, 0.70710677
        %v1305 = verf.f32.pop %v1304
        %v1306 = vadd.f32 %v1305, 1.0
        %v1307 = vmul.f32 %v1303, %v1306
        %v1308 = vld [vmem:[%s6] sm:$0xff]
        %v1309 = vld [vmem:[%s6 + $0x8] sm:$0xff]
        %v1310 = vld [vmem:[%s6 + $0x10] sm:$0xff]
        %v1311 = vld [vmem:[%s6 + $0x18] sm:$0xff]
        %v1312 = vld [vmem:[%s6 + $0x20] sm:$0xff]
        %v1313 = vld [vmem:[%s6 + $0x28] sm:$0xff]
        %v1314 = vld [vmem:[%s6 + $0x30] sm:$0xff]
        %v1315 = vld [vmem:[%s6 + $0x38] sm:$0xff]
        %v1316 = vlaneseq
        %v1317 = vshrl.u32 %v1316, 7
        %v1318 = vsub.s32 0, %v1317
        %v1319 = vrot.slane %v323, %v1318
        %vm1320 = vcmask 523264
        %v1322 = vsel %vm1320, %v1307, 0
        %1324 = vmatprep.subr.mxu0 0.0
        %1325 = vmatpush1.msra.mxu0 %v1308
        %1326 = vmatprep.subr.mxu0 0.0
        %1327 = vmatpush1.msra.mxu0 %v1309
        %1328 = vmatprep.subr.mxu0 0.0
        %1329 = vmatpush1.msra.mxu0 %v1310
        %1330 = vmatprep.subr.mxu0 0.0
        %1331 = vmatpush1.msra.mxu0 %v1311
        %1332 = vmatprep.subr.mxu0 0.0
        %1333 = vmatpush1.msra.mxu0 %v1312
        %1334 = vmatprep.subr.mxu0 0.0
        %1335 = vmatpush1.msra.mxu0 %v1313
        %1336 = vmatprep.subr.mxu0 0.0
        %1337 = vmatpush1.msra.mxu0 %v1314
        %1338 = vmatprep.subr.mxu0 0.0
        %1339 = vmatpush1.msra.mxu0 %v1315
        %1340 = vmatprep.subr.mxu0 0.0
        %1341 = vmatpush1.msra.mxu0 0.0
        %1342 = vmatprep.subr.mxu0 0.0
        %1343 = vmatpush1.msra.mxu0 0.0
        %1344 = vmatprep.subr.mxu0 0.0
        %1345 = vmatpush1.msra.mxu0 0.0
        %1346 = vmatprep.subr.mxu0 0.0
        %1347 = vmatpush1.msra.mxu0 0.0
        %1348 = vmatprep.subr.mxu0 0.0
        %1349 = vmatpush1.msra.mxu0 0.0
        %1350 = vmatprep.subr.mxu0 0.0
        %1351 = vmatpush1.msra.mxu0 0.0
        %1352 = vmatprep.subr.mxu0 0.0
        %1353 = vmatpush1.msra.mxu0 0.0
        %1354 = vmatprep.subr.mxu0 0.0
        %1355 = vmatpush1.msra.mxu0 0.0
        %1356 = vmatprep.subr.mxu0 0.0
        %1357 = vmatpush1.msra.mxu0 0.0
        %1358 = vmatprep.subr.mxu0 0.0
        %1359 = vmatpush1.msra.mxu0 0.0
        %1360 = vmatprep.subr.mxu0 0.0
        %1361 = vmatpush1.msra.mxu0 0.0
        %1362 = vmatprep.subr.mxu0 0.0
        %1363 = vmatpush1.msra.mxu0 0.0
        %1364 = vmatprep.subr.mxu0 0.0
        %1365 = vmatpush1.msra.mxu0 0.0
        %1366 = vmatprep.subr.mxu0 0.0
        %1367 = vmatpush1.msra.mxu0 0.0
        %1368 = vmatprep.subr.mxu0 0.0
        %1369 = vmatpush1.msra.mxu0 0.0
        %1370 = vmatprep.subr.mxu0 0.0
        %1371 = vmatpush1.msra.mxu0 0.0
        %1372 = vmatprep.subr.mxu0 0.0
        %1373 = vmatpush1.msra.mxu0 0.0
        %1374 = vmatprep.subr.mxu0 0.0
        %1375 = vmatpush1.msra.mxu0 0.0
        %1376 = vmatprep.subr.mxu0 0.0
        %1377 = vmatpush1.msra.mxu0 0.0
        %1378 = vmatprep.subr.mxu0 0.0
        %1379 = vmatpush1.msra.mxu0 0.0
        %1380 = vmatprep.subr.mxu0 0.0
        %1381 = vmatpush1.msra.mxu0 0.0
        %1382 = vmatprep.subr.mxu0 0.0
        %1383 = vmatpush1.msra.mxu0 0.0
        %1384 = vmatprep.subr.mxu0 0.0
        %1385 = vmatpush1.msra.mxu0 0.0
        %1386 = vmatprep.subr.mxu0 0.0
        %1387 = vmatpush1.msra.mxu0 0.0
        %1388 = vmatprep.mubr.f32.mxu0 0.0
        %1389 = vmatmul.mubr.f32.gmra.mrb[0].mxu0 %v1322
        %v1390 = vpop.f32.mrb[0].mxu0
        %v1391 = vadd.f32 %v1319, %v1390
        %v1392 = vpop.f32.mrb[0].mxu0
        %1393 = vdwg.mxu0
        %v1394 = vadd.f32 %v1391, %v1195
        %1395 = vst.msk [vmem:[%s320] sm:$0xff] %vm328, %v1394
        %s1396 = sand.u32 %s206, 1
        %s1397 = scalar_lea.sflag [#allocation4], %s1396
        %s1398 = sand.u32 %s206, 1
        %s1399 = smul.addr %s1398, 8
        %s1400 = scalar_lea.vmem [#allocation5], %s1399
        // Predicated region
        $region57: #{tpu_custom_call.1} parent=51 // pred_check
          %p1401 = pneg %p216
        $region58: #{tpu_custom_call.1} parent=51 // pred_check_branch
          %1403 = sbr.rel (%p1401) target = $region60
        $region59: #{tpu_custom_call.1} parent=51 // pred_region
          %s1405 = ssub.s32 128, 128
          %1406 = vsyncadd %s1397, %s1405
          %s1407 = smul.addr %s25, 128
          %s1408 = scalar_lea.hbm %s8, %s1407
          %s1410 = sshll.u32 %s1400, 4
          %s1411 = int_to_ptr.vmem [resolvable:$true] %s1410
          %1413 = dma.vmem_to_hbm [thread:$0]  %s1411, 128, %s1408, %s1397
        $region60: #{tpu_custom_call.1} parent=51 // pred_fallthru
          _
      $region52: #{tpu_custom_call.1} parent=5 // pred_fallthru
        _
      %p1414 = scmp.le.s32.totalorder 2, %s20
      // Predicated region
      $region61: #{tpu_custom_call.1} parent=5 // pred_check
        %p1415 = pneg %p1414
      $region62: #{tpu_custom_call.1} parent=5 // pred_check_branch
        %1417 = sbr.rel (%p1415) target = $region64
      $region63: #{tpu_custom_call.1} parent=5 // pred_region
        %s1418 = ssub.s32 %s20, 2
        // Predicated region
        $region65: #{tpu_custom_call.1} parent=63 // pred_check
          %p1419 = pneg %p222
        $region66: #{tpu_custom_call.1} parent=63 // pred_check_branch
          %1421 = sbr.rel (%p1419) target = $region68
        $region67: #{tpu_custom_call.1} parent=63 // pred_region
          %s1422 = sand.u32 %s207, 1
          %s1423 = scalar_lea.sflag [#allocation4], %s1422
          %s1424 = sand.u32 %s207, 1
          %s1425 = smul.addr %s1424, 8
          %s1426 = scalar_lea.vmem [#allocation5], %s1425
          %1427 = dma.done %s1423, 128
        $region68: #{tpu_custom_call.1} parent=63 // pred_fallthru
          _
      $region64: #{tpu_custom_call.1} parent=5 // pred_fallthru
        _
    $region6: #{tpu_custom_call.1} parent=1 // loop_footer
      %s24 = sadd.s32 1, %s20
    $region7: #{tpu_custom_call.1} parent=1 // loop_footer_branch
      %19 = sbr.rel target = $region3
    $region8: #{tpu_custom_call.1} parent=1 // loop_exit
      _
    %1428 = vsyncpa [#allocation3], 1
    %s1429 = scalar_lea.sflag [#allocation3], 1
    %1430 = vsyncpa %s1429, 1
    %1431 = vsyncpa [#allocation4], 1
    %s1432 = scalar_lea.sflag [#allocation4], 1
    %1433 = vsyncpa %s1432, 1

</llo_original>
